<compile_context>
chip_gen: v5e
topology: v5e:2x2
jax: 0.10.0
libtpu: 0.0.40
codegen_flags: <defaults>
</compile_context>

<pallas_src>
import math

import jax
import jax.numpy as jnp
from jax import lax
from jax.experimental import pallas as pl
from jax.experimental.pallas import tpu as pltpu


# ----------------------------- Pallas kernel ------------------------------ #

def _gemm_bias_relu_kernel(w_ref, x_ref, b_ref, o_ref):
    # w: (Cout, K) bf16 | x: (K, tn) bf16 | b: (Cout, 1) f32 | o: (Cout, tn)
    acc = jnp.dot(w_ref[...], x_ref[...], preferred_element_type=jnp.float32)
    o_ref[...] = jnp.maximum(acc + b_ref[...], 0.0).astype(o_ref.dtype)


def _choose_m_tile(M, target=512):
    """Largest lane tile <= target that divides M (multiple of 128), else M."""
    if M % 128 != 0:
        return M
    t = min(target, M)
    while M % t:
        t -= 128
    return t


def gemm_bias_relu_T(w, cols, bias_col, out_dtype=jnp.float32):
    """relu(w @ cols + bias) with lane-dense (Cout, M) output, in one/few blocks."""
    Cout, K = w.shape
    K2, M = cols.shape
    assert K == K2
    tn = _choose_m_tile(M)
    return pl.pallas_call(
        _gemm_bias_relu_kernel,
        out_shape=jax.ShapeDtypeStruct((Cout, M), out_dtype),
        grid=(M // tn,),
        in_specs=[
            pl.BlockSpec((Cout, K), lambda j: (0, 0)),   # full weight (tiny)
            pl.BlockSpec((K, tn), lambda j: (0, j)),     # cols: lane tile of M
            pl.BlockSpec((Cout, 1), lambda j: (0, 0)),   # bias column
        ],
        out_specs=pl.BlockSpec((Cout, tn), lambda j: (0, j)),
        compiler_params=pltpu.CompilerParams(
            dimension_semantics=("parallel",)),
    )(w, cols, bias_col)


# ------------------------- im2col glue (plain JAX) ------------------------ #

def _im2col_2d_T(x, k, s, p):
    """(N,C,H,W) -> cols (C*k*k, N*Ho*Wo); row index = c*k*k + ki*k + kj."""
    N, C, H, W = x.shape
    xp = jnp.pad(x, ((0, 0), (0, 0), (p, p), (p, p)))
    Ho = (H + 2 * p - k) // s + 1
    Wo = (W + 2 * p - k) // s + 1
    patches = []
    for ki in range(k):
        for kj in range(k):
            patches.append(xp[:, :, ki:ki + s * Ho:s, kj:kj + s * Wo:s])
    stk = jnp.stack(patches, axis=2)                    # (N, C, k*k, Ho, Wo)
    cols = stk.transpose(1, 2, 0, 3, 4).reshape(C * k * k, N * Ho * Wo)
    return cols, Ho, Wo


def conv_stage(x, w_merged, bias_col, *, k, s, p, out_dtype=jnp.float32):
    """One merged (rgb|depth) conv + ReLU stage as a transposed im2col GEMM."""
    N = x.shape[0]
    cols, Ho, Wo = _im2col_2d_T(x.astype(jnp.bfloat16), k, s, p)
    y = gemm_bias_relu_T(w_merged, cols, bias_col, out_dtype)  # (Cout, N*Ho*Wo)
    Cout = w_merged.shape[0]
    return y.reshape(Cout, N, Ho, Wo).transpose(1, 0, 2, 3)


def mic_conv1d_relu(x, w, b, *, stride, padding):
    # x: (N, Cin, L); w: (Cout, Cin, kk); b: (Cout,).  Plain XLA on purpose:
    # M is only 4-8 rows, a pallas launch here would be pure overhead.
    Cout, Cin, kk = w.shape
    N, _, L = x.shape
    xp = jnp.pad(x, ((0, 0), (0, 0), (padding, padding)))
    Lo = (L + 2 * padding - kk) // stride + 1
    patches = [xp[:, :, j:j + stride * Lo:stride] for j in range(kk)]
    cols = jnp.stack(patches, axis=2).transpose(0, 3, 1, 2).reshape(N * Lo, Cin * kk)
    out = jnp.maximum(
        jnp.dot(cols, w.reshape(Cout, Cin * kk).T,
                precision=jax.lax.Precision.HIGHEST) + b, 0.0)
    return out.reshape(N, Lo, Cout).transpose(0, 2, 1)


# ------------------------- weight construction ---------------------------- #

def _init_conv(key, cout, cin, *ks):
    fan_in = cin
    for kk in ks:
        fan_in *= kk
    bound = 1.0 / math.sqrt(fan_in)
    kw, kb = jax.random.split(key)
    w = jax.random.uniform(kw, (cout, cin) + tuple(ks), jnp.float32, -bound, bound)
    b = jax.random.uniform(kb, (cout,), jnp.float32, -bound, bound)
    return w, b


def _block_diag(a, b):
    ra, ca = a.shape
    rb, cb = b.shape
    top = jnp.concatenate([a, jnp.zeros((ra, cb), a.dtype)], axis=1)
    bot = jnp.concatenate([jnp.zeros((rb, ca), b.dtype), b], axis=1)
    return jnp.concatenate([top, bot], axis=0)


def _merge_stage(conv_rgb, conv_depth):
    """Block-diagonal merge so one GEMM computes both rgb and depth branches."""
    wr, br = conv_rgb
    wd, bd = conv_depth
    W = _block_diag(wr.reshape(wr.shape[0], -1), wd.reshape(wd.shape[0], -1))
    b = jnp.concatenate([br, bd])[:, None]
    return W.astype(jnp.bfloat16), b.astype(jnp.float32)


# ------------------------------ the module -------------------------------- #

class MultisensoryPallas:
    """Mirrors Multisensory_module (unimodal=False path)."""

    def __init__(self, key):
        ks = jax.random.split(key, 13)
        self.conv1r = _init_conv(ks[0], 16, 3, 2, 2)
        self.conv2r = _init_conv(ks[1], 16, 16, 3, 3)
        self.conv3r = _init_conv(ks[2], 16, 16, 2, 2)
        self.conv1d = _init_conv(ks[3], 8, 1, 2, 2)
        self.conv2d = _init_conv(ks[4], 8, 8, 3, 3)
        self.conv3d = _init_conv(ks[5], 8, 8, 2, 2)
        self.conv1l = _init_conv(ks[6], 8, 1, 18)
        self.conv2l = _init_conv(ks[7], 16, 8, 2)
        # Defined in __init__ but unused by forward (kept for shape fidelity).
        self.conv3l = _init_conv(ks[8], 32, 16, 2)
        self.conv4l = _init_conv(ks[9], 16, 32, 3)
        self.conv5l = _init_conv(ks[10], 32, 16, 2)
        self.conv1m = _init_conv(ks[11], 12, 1, 2)
        self.conv2m = _init_conv(ks[12], 8, 12, 2)

        # Per-stage merged (rgb + depth) weights: bf16 matmul inputs, f32 bias.
        self.W1, self.b1 = _merge_stage(self.conv1r, self.conv1d)   # (24, 16)
        self.W2, self.b2 = _merge_stage(self.conv2r, self.conv2d)   # (24, 216)
        self.W3, self.b3 = _merge_stage(self.conv3r, self.conv3d)   # (24, 96)

        self._jit_forward = jax.jit(self._forward)

    def _forward(self, r, d, t, m):
        B, T = r.shape[:2]
        N = B * T
        # --- rgb + depth branches, merged per conv stage ---
        x = jnp.concatenate(
            [r.reshape(N, *r.shape[2:]), d.reshape(N, *d.shape[2:])], axis=1)
        # Intermediate stages emit bf16 (fused cast in the kernel epilogue);
        # the next stage would cast to bf16 anyway, so numerics are identical.
        x = conv_stage(x, self.W1, self.b1, k=2, s=2, p=0,
                       out_dtype=jnp.bfloat16)            # (N, 24, 16, 16)
        x = conv_stage(x, self.W2, self.b2, k=3, s=1, p=1,
                       out_dtype=jnp.bfloat16)            # (N, 24, 16, 16)
        x = conv_stage(x, self.W3, self.b3, k=2, s=2, p=0,
                       out_dtype=jnp.float32)             # (N, 24, 8, 8)
        # --- tactile branch: t[i].repeat(1,1,8,8) ---
        tt = jnp.tile(t.reshape(N, t.shape[2], 1, 1), (1, 1, 8, 8))
        # --- mic branch (tiny, plain XLA) ---
        mm = m.reshape(N, *m.shape[2:])
        mm = mic_conv1d_relu(mm, *self.conv1l, stride=9, padding=9)
        mm = mic_conv1d_relu(mm, *self.conv2l, stride=2, padding=0)  # (N, 16, 1)
        mm = jnp.tile(mm.reshape(N, 2, 8, 1), (1, 1, 1, 8))
        # x channels are already ordered [rr(16) | dd(8)]
        return jnp.concatenate([x, tt, mm], axis=1)

    def __call__(self, r, d, t, m):
        return self._jit_forward(r, d, t, m)


# ------------------------- pure-JAX reference check ----------------------- #

def _ref_forward(mod, r, d, t, m):
    def c2(x, wb, s, p):
        # Same numerics as the kernel: bf16 products, f32 accumulation/epilogue.
        w, b = wb
        y = lax.conv_general_dilated(
            x.astype(jnp.bfloat16), w.astype(jnp.bfloat16), (s, s),
            [(p, p), (p, p)],
            dimension_numbers=('NCHW', 'OIHW', 'NCHW'),
            preferred_element_type=jnp.float32)
        return jax.nn.relu(y + b[None, :, None, None])

    def c1(x, wb, s, p):
        w, b = wb
        y = lax.conv_general_dilated(
            x, w, (s,), [(p, p)],
            dimension_numbers=('NCH', 'OIH', 'NCH'),
            precision=jax.lax.Precision.HIGHEST)
        return jax.nn.relu(y + b[None, :, None])

    B, T = r.shape[:2]
    N = B * T
    rr = r.reshape(N, *r.shape[2:])
    rr = c2(c2(c2(rr, mod.conv1r, 2, 0), mod.conv2r, 1, 1), mod.conv3r, 2, 0)
    dd = d.reshape(N, *d.shape[2:])
    dd = c2(c2(c2(dd, mod.conv1d, 2, 0), mod.conv2d, 1, 1), mod.conv3d, 2, 0)
    tt = jnp.tile(t.reshape(N, t.shape[2], 1, 1), (1, 1, 8, 8))
    mm = m.reshape(N, *m.shape[2:])
    mm = c1(c1(mm, mod.conv1l, 9, 9), mod.conv2l, 2, 0)
    mm = jnp.tile(mm.reshape(N, 2, 8, 1), (1, 1, 1, 8))
    return jnp.concatenate([rr, dd, tt, mm], axis=1)


# ---------------------------------- main ----------------------------------- #

if __name__ == "__main__":
    key = jax.random.PRNGKey(0)
    kr, kd, kt, km, kp = jax.random.split(key, 5)

    B, T = 2, 2           # batch_size=2, 2 frames per sample
    H = W = 32            # spatial so that conv stack ends at 8x8
    Ct = 2                # tactile channels
    L = 9                 # mic length so conv1l->conv2l ends at length 1

    r = jax.random.normal(kr, (B, T, 3, H, W), jnp.float32)
    d = jax.random.normal(kd, (B, T, 1, H, W), jnp.float32)
    t = jax.random.normal(kt, (B, T, Ct, 1, 1), jnp.float32)
    m = jax.random.normal(km, (B, T, 1, L), jnp.float32)

    mod = MultisensoryPallas(kp)

    out = jax.block_until_ready(mod(r, d, t, m))
    assert out.shape == (B * T, 16 + 8 + Ct + 2, 8, 8), out.shape

    ref = jax.block_until_ready(_ref_forward(mod, r, d, t, m))
    assert jnp.allclose(out, ref, rtol=2e-3, atol=2e-3), float(
        jnp.max(jnp.abs(out - ref)))

    print("KERNEL_OK")
</pallas_src>

<mosaic_0001>
module attributes {stable_mosaic.version = 11 : i64} {
  func.func @_gemm_bias_relu_kernel(%arg0: i32, %arg1: memref<24x16xbf16, #tpu.memory_space<vmem>>, %arg2: memref<16x512xbf16, #tpu.memory_space<vmem>>, %arg3: memref<24x1xf32, #tpu.memory_space<vmem>>, %arg4: memref<24x512xbf16, #tpu.memory_space<vmem>>) attributes {dimension_semantics = [#tpu.dimension_semantics<parallel>], iteration_bounds = array<i64: 2>, scalar_prefetch = 0 : i64, scratch_operands = 0 : i64, tpu.core_type = #tpu.core_type<tc>, window_params = [{pipeline_mode = #tpu.pipeline_mode<synchronous>, transform_indices = @transform_0, window_bounds = array<i64: 24, 16>}, {transform_indices = @transform_1, window_bounds = array<i64: 16, 512>}, {pipeline_mode = #tpu.pipeline_mode<synchronous>, transform_indices = @transform_2, window_bounds = array<i64: 24, 1>}, {transform_indices = @transform_3, window_bounds = array<i64: 24, 512>}]} {
    %c0 = arith.constant 0 : index
    %c0_0 = arith.constant 0 : index
    %0 = vector.load %arg1[%c0, %c0_0] : memref<24x16xbf16, #tpu.memory_space<vmem>>, vector<24x16xbf16>
    %c0_1 = arith.constant 0 : index
    %c0_2 = arith.constant 0 : index
    %1 = vector.load %arg2[%c0_1, %c0_2] : memref<16x512xbf16, #tpu.memory_space<vmem>>, vector<16x512xbf16>
    %cst = arith.constant dense<0.000000e+00> : vector<24x512xf32>
    %2 = tpu.matmul %0, %1, %cst {dimension_numbers = #tpu.dot_dimension_numbers<[1], [0], [0], [1], [0, 0, 1, 1], [], []>} : vector<24x16xbf16>, vector<16x512xbf16>, vector<24x512xf32> -> vector<24x512xf32>
    %c0_3 = arith.constant 0 : index
    %c0_4 = arith.constant 0 : index
    %3 = vector.load %arg3[%c0_3, %c0_4] : memref<24x1xf32, #tpu.memory_space<vmem>>, vector<24x1xf32>
    %4 = vector.broadcast %3 : vector<24x1xf32> to vector<24x512xf32>
    %5 = arith.addf %2, %4 : vector<24x512xf32>
    %cst_5 = arith.constant 0.000000e+00 : f32
    %6 = vector.broadcast %cst_5 : f32 to vector<24x512xf32>
    %7 = arith.maximumf %5, %6 : vector<24x512xf32>
    %8 = arith.truncf %7 : vector<24x512xf32> to vector<24x512xbf16>
    %c0_6 = arith.constant 0 : index
    %c0_7 = arith.constant 0 : index
    %9 = vector.load %arg4[%c0_6, %c0_7] : memref<24x512xbf16, #tpu.memory_space<vmem>>, vector<24x512xbf16>
    tpu.vector_store %arg4[%c0_6, %c0_7], %8 {strides = array<i32>} : memref<24x512xbf16, #tpu.memory_space<vmem>>, vector<24x512xbf16>,
    return
  }
  func.func @transform_0(%arg0: i32) -> (i32, i32) {
    %c0_i32 = arith.constant 0 : i32
    %c0_i32_0 = arith.constant 0 : i32
    %c0_i32_1 = arith.constant 0 : i32
    return %c0_i32, %c0_i32_0 : i32, i32
  }
  func.func @transform_1(%arg0: i32) -> (i32, i32) {
    %c0_i32 = arith.constant 0 : i32
    %c0_i32_0 = arith.constant 0 : i32
    return %c0_i32, %arg0 : i32, i32
  }
  func.func @transform_2(%arg0: i32) -> (i32, i32) {
    %c0_i32 = arith.constant 0 : i32
    %c0_i32_0 = arith.constant 0 : i32
    %c0_i32_1 = arith.constant 0 : i32
    return %c0_i32, %c0_i32_0 : i32, i32
  }
  func.func @transform_3(%arg0: i32) -> (i32, i32) {
    %c0_i32 = arith.constant 0 : i32
    %c0_i32_0 = arith.constant 0 : i32
    return %c0_i32, %arg0 : i32, i32
  }
}

module attributes {stable_mosaic.version = 11 : i64} {
  func.func @_gemm_bias_relu_kernel(%arg0: i32, %arg1: memref<24x216xbf16, #tpu.memory_space<vmem>>, %arg2: memref<216x512xbf16, #tpu.memory_space<vmem>>, %arg3: memref<24x1xf32, #tpu.memory_space<vmem>>, %arg4: memref<24x512xbf16, #tpu.memory_space<vmem>>) attributes {dimension_semantics = [#tpu.dimension_semantics<parallel>], iteration_bounds = array<i64: 2>, scalar_prefetch = 0 : i64, scratch_operands = 0 : i64, tpu.core_type = #tpu.core_type<tc>, window_params = [{pipeline_mode = #tpu.pipeline_mode<synchronous>, transform_indices = @transform_0, window_bounds = array<i64: 24, 216>}, {transform_indices = @transform_1, window_bounds = array<i64: 216, 512>}, {pipeline_mode = #tpu.pipeline_mode<synchronous>, transform_indices = @transform_2, window_bounds = array<i64: 24, 1>}, {transform_indices = @transform_3, window_bounds = array<i64: 24, 512>}]} {
    %c0 = arith.constant 0 : index
    %c0_0 = arith.constant 0 : index
    %0 = vector.load %arg1[%c0, %c0_0] : memref<24x216xbf16, #tpu.memory_space<vmem>>, vector<24x216xbf16>
    %c0_1 = arith.constant 0 : index
    %c0_2 = arith.constant 0 : index
    %1 = vector.load %arg2[%c0_1, %c0_2] : memref<216x512xbf16, #tpu.memory_space<vmem>>, vector<216x512xbf16>
    %cst = arith.constant dense<0.000000e+00> : vector<24x512xf32>
    %2 = tpu.matmul %0, %1, %cst {dimension_numbers = #tpu.dot_dimension_numbers<[1], [0], [0], [1], [0, 0, 1, 1], [], []>} : vector<24x216xbf16>, vector<216x512xbf16>, vector<24x512xf32> -> vector<24x512xf32>
    %c0_3 = arith.constant 0 : index
    %c0_4 = arith.constant 0 : index
    %3 = vector.load %arg3[%c0_3, %c0_4] : memref<24x1xf32, #tpu.memory_space<vmem>>, vector<24x1xf32>
    %4 = vector.broadcast %3 : vector<24x1xf32> to vector<24x512xf32>
    %5 = arith.addf %2, %4 : vector<24x512xf32>
    %cst_5 = arith.constant 0.000000e+00 : f32
    %6 = vector.broadcast %cst_5 : f32 to vector<24x512xf32>
    %7 = arith.maximumf %5, %6 : vector<24x512xf32>
    %8 = arith.truncf %7 : vector<24x512xf32> to vector<24x512xbf16>
    %c0_6 = arith.constant 0 : index
    %c0_7 = arith.constant 0 : index
    %9 = vector.load %arg4[%c0_6, %c0_7] : memref<24x512xbf16, #tpu.memory_space<vmem>>, vector<24x512xbf16>
    tpu.vector_store %arg4[%c0_6, %c0_7], %8 {strides = array<i32>} : memref<24x512xbf16, #tpu.memory_space<vmem>>, vector<24x512xbf16>,
    return
  }
  func.func @transform_0(%arg0: i32) -> (i32, i32) {
    %c0_i32 = arith.constant 0 : i32
    %c0_i32_0 = arith.constant 0 : i32
    %c0_i32_1 = arith.constant 0 : i32
    return %c0_i32, %c0_i32_0 : i32, i32
  }
  func.func @transform_1(%arg0: i32) -> (i32, i32) {
    %c0_i32 = arith.constant 0 : i32
    %c0_i32_0 = arith.constant 0 : i32
    return %c0_i32, %arg0 : i32, i32
  }
  func.func @transform_2(%arg0: i32) -> (i32, i32) {
    %c0_i32 = arith.constant 0 : i32
    %c0_i32_0 = arith.constant 0 : i32
    %c0_i32_1 = arith.constant 0 : i32
    return %c0_i32, %c0_i32_0 : i32, i32
  }
  func.func @transform_3(%arg0: i32) -> (i32, i32) {
    %c0_i32 = arith.constant 0 : i32
    %c0_i32_0 = arith.constant 0 : i32
    return %c0_i32, %arg0 : i32, i32
  }
}

module attributes {stable_mosaic.version = 11 : i64} {
  func.func @_gemm_bias_relu_kernel(%arg0: i32, %arg1: memref<24x96xbf16, #tpu.memory_space<vmem>>, %arg2: memref<96x256xbf16, #tpu.memory_space<vmem>>, %arg3: memref<24x1xf32, #tpu.memory_space<vmem>>, %arg4: memref<24x256xf32, #tpu.memory_space<vmem>>) attributes {dimension_semantics = [#tpu.dimension_semantics<parallel>], iteration_bounds = array<i64: 1>, scalar_prefetch = 0 : i64, scratch_operands = 0 : i64, tpu.core_type = #tpu.core_type<tc>, window_params = [{pipeline_mode = #tpu.pipeline_mode<synchronous>, transform_indices = @transform_0, window_bounds = array<i64: 24, 96>}, {transform_indices = @transform_1, window_bounds = array<i64: 96, 256>}, {pipeline_mode = #tpu.pipeline_mode<synchronous>, transform_indices = @transform_2, window_bounds = array<i64: 24, 1>}, {transform_indices = @transform_3, window_bounds = array<i64: 24, 256>}]} {
    %c0 = arith.constant 0 : index
    %c0_0 = arith.constant 0 : index
    %0 = vector.load %arg1[%c0, %c0_0] : memref<24x96xbf16, #tpu.memory_space<vmem>>, vector<24x96xbf16>
    %c0_1 = arith.constant 0 : index
    %c0_2 = arith.constant 0 : index
    %1 = vector.load %arg2[%c0_1, %c0_2] : memref<96x256xbf16, #tpu.memory_space<vmem>>, vector<96x256xbf16>
    %cst = arith.constant dense<0.000000e+00> : vector<24x256xf32>
    %2 = tpu.matmul %0, %1, %cst {dimension_numbers = #tpu.dot_dimension_numbers<[1], [0], [0], [1], [0, 0, 1, 1], [], []>} : vector<24x96xbf16>, vector<96x256xbf16>, vector<24x256xf32> -> vector<24x256xf32>
    %c0_3 = arith.constant 0 : index
    %c0_4 = arith.constant 0 : index
    %3 = vector.load %arg3[%c0_3, %c0_4] : memref<24x1xf32, #tpu.memory_space<vmem>>, vector<24x1xf32>
    %4 = vector.broadcast %3 : vector<24x1xf32> to vector<24x256xf32>
    %5 = arith.addf %2, %4 : vector<24x256xf32>
    %cst_5 = arith.constant 0.000000e+00 : f32
    %6 = vector.broadcast %cst_5 : f32 to vector<24x256xf32>
    %7 = arith.maximumf %5, %6 : vector<24x256xf32>
    %c0_6 = arith.constant 0 : index
    %c0_7 = arith.constant 0 : index
    %8 = vector.load %arg4[%c0_6, %c0_7] : memref<24x256xf32, #tpu.memory_space<vmem>>, vector<24x256xf32>
    tpu.vector_store %arg4[%c0_6, %c0_7], %7 {strides = array<i32>} : memref<24x256xf32, #tpu.memory_space<vmem>>, vector<24x256xf32>,
    return
  }
  func.func @transform_0(%arg0: i32) -> (i32, i32) {
    %c0_i32 = arith.constant 0 : i32
    %c0_i32_0 = arith.constant 0 : i32
    %c0_i32_1 = arith.constant 0 : i32
    return %c0_i32, %c0_i32_0 : i32, i32
  }
  func.func @transform_1(%arg0: i32) -> (i32, i32) {
    %c0_i32 = arith.constant 0 : i32
    %c0_i32_0 = arith.constant 0 : i32
    return %c0_i32, %arg0 : i32, i32
  }
  func.func @transform_2(%arg0: i32) -> (i32, i32) {
    %c0_i32 = arith.constant 0 : i32
    %c0_i32_0 = arith.constant 0 : i32
    %c0_i32_1 = arith.constant 0 : i32
    return %c0_i32, %c0_i32_0 : i32, i32
  }
  func.func @transform_3(%arg0: i32) -> (i32, i32) {
    %c0_i32 = arith.constant 0 : i32
    %c0_i32_0 = arith.constant 0 : i32
    return %c0_i32, %arg0 : i32, i32
  }
}

</mosaic_0001>

<llo_original>
// kernel: _forward.3
$region0: #{_forward.3}
  #allocation0 [shape = 'u32[]', space=smem, size = 0x4, offset = 0x4, fixed_abs, tag = 'smem constant byte address 0x4 - core index']
  #allocation1 [shape = 'u32[72,128]{1,0:T(1,128)}', space=vmem, size = 0x9000, scoped, tag = 'internal scratch']
  %s0 = inlined_call_operand.hbm [shape: bf16[24,16], index: 0, kind: input, shape index: {}]
  %s1 = inlined_call_operand.vmem [shape: bf16[16,1024], index: 1, kind: input, shape index: {}]
  %s2 = inlined_call_operand.hbm [shape: f32[24,1], index: 2, kind: input, shape index: {}]
  %s3 = inlined_call_operand.vmem [shape: bf16[24,1024], index: 3, kind: output, shape index: {}]
  %s4 = sld [smem:[#allocation0]]
  $region95: #{_forward.3} parent=0
    _
  %s6 = ssub.s32 1, %s4
  %s7 = scalar_select 0, %s6, %s4
  $region1: #{_forward.3} parent=0
    #allocation2 [shape = 'u8[6144]{0}', space=vmem, size = 0x1800, scoped, tag = 'input window, operand 0, single buffered']
    #allocation3 [shape = 's32[2]{0}', space=sflag, size = 0x8, scoped, tag = 'scoped memory for _forward.3']
    #allocation4 [shape = 'u8[32768]{0}', space=vmem, size = 0x8000, scoped, tag = 'input window, operand 1']
    #allocation5 [shape = 'u8[12288]{0}', space=vmem, size = 0x3000, scoped, tag = 'input window, operand 2, single buffered']
    #allocation6 [shape = 's32[1]{0}', space=sflag, size = 0x4, scoped, tag = 'scoped memory for _forward.3']
    #allocation7 [shape = 'u8[49152]{0}', space=vmem, size = 0xc000, scoped, tag = 'output window, operand 0']
    %8 = vsyncpa [#allocation3], 0
    %9 = vsyncpa [#allocation6], 0
    loop: start=0, step=1, limit=4
    $region2: #{_forward.3} parent=1 // loop_pre_header
      _
    $region3: #{_forward.3} parent=1 // loop_header
      %s11 = sphi 0, %s15
      %p12 = scmp.ge.s32.totalorder %s11, 4
      %s19 = sphi 0, %s19
      %s21 = sphi 0, %s19
      %s22 = sphi 0, %s21
      %s36 = sphi 0, %s22
      %s42 = sphi 0, %s44
      %s45 = sphi 0, %s42
      %s46 = sphi 0, %s45
      %s62 = sphi 0, %s46
      %s66 = sphi 0, %s66
      %s68 = sphi 0, %s66
      %s69 = sphi 0, %s68
      %s83 = sphi 0, %s69
      %s89 = sphi 0, %s91
      %s92 = sphi 0, %s89
      %s93 = sphi 0, %s92
      %s109 = sphi 0, %s93
    $region4: #{_forward.3} parent=1 // loop_header_branch
      %14 = sbr.rel (%p12) target = $region8
    $region5: #{_forward.3} parent=1 // loop_body
      %s16 = ssub.s32 %s11, 1
      %s17 = ssub.s32 %s11, 2
      %s18 = sadd.s32 %s11, 1
      %s20 = sadd.s32 %s19, 1
      %p23 = scmp.eq.s32.totalorder %s11, 1
      %p24 = scmp.ne.s32.totalorder %s19, %s21
      %p25 = scmp.eq.s32.totalorder %s11, 0
      %p26 = por %p24, %p25
      %p27 = scmp.ne.s32.totalorder %s19, %s21
      %p28 = scmp.eq.s32.totalorder %s16, 1
      %p29 = por %p27, %p28
      %p30 = scmp.ne.s32.totalorder %s21, %s22
      %p31 = scmp.eq.s32.totalorder %s16, 0
      %p32 = por %p30, %p31
      %p33 = scmp.ne.s32.totalorder %s21, %s22
      %p34 = scmp.eq.s32.totalorder %s17, 1
      %p35 = por %p33, %p34
      %p37 = scmp.ne.s32.totalorder %s22, %s36
      %p38 = scmp.eq.s32.totalorder %s17, 0
      %p39 = por %p37, %p38
      %s40 = ssub.s32 %s11, %s18
      %p41 = scmp.eq.s32.totalorder %s40, 0
      %s43 = sadd.s32 %s42, 1
      %s44 = scalar_select %p41, %s42, %s43
      %p47 = pneg %p41
      %p48 = scmp.eq.s32.totalorder %s11, 1
      %p49 = por %p47, %p48
      %p50 = scmp.ne.s32.totalorder %s42, %s45
      %p51 = scmp.eq.s32.totalorder %s11, 0
      %p52 = por %p50, %p51
      %p53 = scmp.ne.s32.totalorder %s42, %s45
      %p54 = scmp.eq.s32.totalorder %s16, 1
      %p55 = por %p53, %p54
      %p56 = scmp.ne.s32.totalorder %s45, %s46
      %p57 = scmp.eq.s32.totalorder %s16, 0
      %p58 = por %p56, %p57
      %p59 = scmp.ne.s32.totalorder %s45, %s46
      %p60 = scmp.eq.s32.totalorder %s17, 1
      %p61 = por %p59, %p60
      %p63 = scmp.ne.s32.totalorder %s46, %s62
      %p64 = scmp.eq.s32.totalorder %s17, 0
      %p65 = por %p63, %p64
      %s67 = sadd.s32 %s66, 1
      %p70 = scmp.eq.s32.totalorder %s11, 1
      %p71 = scmp.ne.s32.totalorder %s66, %s68
      %p72 = scmp.eq.s32.totalorder %s11, 0
      %p73 = por %p71, %p72
      %p74 = scmp.ne.s32.totalorder %s66, %s68
      %p75 = scmp.eq.s32.totalorder %s16, 1
      %p76 = por %p74, %p75
      %p77 = scmp.ne.s32.totalorder %s68, %s69
      %p78 = scmp.eq.s32.totalorder %s16, 0
      %p79 = por %p77, %p78
      %p80 = scmp.ne.s32.totalorder %s68, %s69
      %p81 = scmp.eq.s32.totalorder %s17, 1
      %p82 = por %p80, %p81
      %p84 = scmp.ne.s32.totalorder %s69, %s83
      %p85 = scmp.eq.s32.totalorder %s17, 0
      %p86 = por %p84, %p85
      %s87 = ssub.s32 %s11, %s18
      %p88 = scmp.eq.s32.totalorder %s87, 0
      %s90 = sadd.s32 %s89, 1
      %s91 = scalar_select %p88, %s89, %s90
      %p94 = pneg %p88
      %p95 = scmp.eq.s32.totalorder %s11, 1
      %p96 = por %p94, %p95
      %p97 = scmp.ne.s32.totalorder %s89, %s92
      %p98 = scmp.eq.s32.totalorder %s11, 0
      %p99 = por %p97, %p98
      %p100 = scmp.ne.s32.totalorder %s89, %s92
      %p101 = scmp.eq.s32.totalorder %s16, 1
      %p102 = por %p100, %p101
      %p103 = scmp.ne.s32.totalorder %s92, %s93
      %p104 = scmp.eq.s32.totalorder %s16, 0
      %p105 = por %p103, %p104
      %p106 = scmp.ne.s32.totalorder %s92, %s93
      %p107 = scmp.eq.s32.totalorder %s17, 1
      %p108 = por %p106, %p107
      %p110 = scmp.ne.s32.totalorder %s93, %s109
      %p111 = scmp.eq.s32.totalorder %s17, 0
      %p112 = por %p110, %p111
      %p113 = scmp.le.s32.totalorder 1, %s11
      %p114 = scmp.lt.s32.totalorder %s11, 3
      %p115 = pnand %p113, %p114
      %p116 = pneg %p115
      // Predicated region
      $region9: #{_forward.3} parent=5 // pred_check
        _
      $region10: #{_forward.3} parent=5 // pred_check_branch
        %118 = sbr.rel (%p115) target = $region12
      $region11: #{_forward.3} parent=5 // pred_region
        %s119 = ssub.s32 %s11, 1
        // Predicated region
        $region13: #{_forward.3} parent=11 // pred_check
          %p120 = pneg %p32
        $region14: #{_forward.3} parent=11 // pred_check_branch
          %122 = sbr.rel (%p120) target = $region16
        $region15: #{_forward.3} parent=11 // pred_region
          %124 = vsyncadd [#allocation3], 0
          %s125 = sshll.u32 %s0, 4
          %s126 = int_to_ptr.hbm [resolvable:$true] %s125
          %s127 = sshll.u32 [#allocation2], 4
          %s128 = int_to_ptr.vmem [resolvable:$true] %s127
          %133 = dma.hbm_to_vmem [thread:$0]  %s126, 192, %s128, [#allocation3], 64, 64, 4
        $region16: #{_forward.3} parent=11 // pred_fallthru
          _
        // Predicated region
        $region17: #{_forward.3} parent=11 // pred_check
          %p134 = pneg %p79
        $region18: #{_forward.3} parent=11 // pred_check_branch
          %136 = sbr.rel (%p134) target = $region20
        $region19: #{_forward.3} parent=11 // pred_region
          %138 = vsyncadd [#allocation6], 0
          %s139 = sshll.u32 %s2, 4
          %s140 = int_to_ptr.hbm [resolvable:$true] %s139
          %s141 = sshll.u32 [#allocation5], 4
          %s142 = int_to_ptr.vmem [resolvable:$true] %s141
          %147 = dma.hbm_to_vmem [thread:$0]  %s140, 384, %s142, [#allocation6], 128, 128, 8
        $region20: #{_forward.3} parent=11 // pred_fallthru
          _
      $region12: #{_forward.3} parent=5 // pred_fallthru
        _
      %p148 = scmp.lt.s32.totalorder %s11, 2
      // Predicated region
      $region21: #{_forward.3} parent=5 // pred_check
        %p149 = pneg %p148
      $region22: #{_forward.3} parent=5 // pred_check_branch
        %151 = sbr.rel (%p149) target = $region24
      $region23: #{_forward.3} parent=5 // pred_region
        // Predicated region
        $region25: #{_forward.3} parent=23 // pred_check
          %p152 = pneg %p52
        $region26: #{_forward.3} parent=23 // pred_check_branch
          %154 = sbr.rel (%p152) target = $region28
        $region27: #{_forward.3} parent=23 // pred_region
          %s155 = sand.u32 %s42, 1
          %s156 = sand.u32 %s42, 1
          %s157 = smul.addr %s156, 32
          %s158 = scalar_lea.vmem [#allocation4], %s157
          %s159 = smul.u32 4, %s11
          %s160 = smul.addr %s159, 4
          %s161 = scalar_lea.vmem %s1, %s160
          // Predicated region
          $region29: #{_forward.3} parent=27 // pred_check
            _
          $region30: #{_forward.3} parent=27 // pred_check_branch
            %163 = sbr.rel (0) target = $region32
          $region31: #{_forward.3} parent=27 // pred_region
            // Predicated region
            $region33: #{_forward.3} parent=31 // pred_check
              _
            $region34: #{_forward.3} parent=31 // pred_check_branch
              %165 = sbr.rel (0) target = $region36
            $region35: #{_forward.3} parent=31 // pred_region
              loop: start=0, step=1, limit=1
              $region37: #{_forward.3} parent=35 // loop_pre_header
                _
              $region38: #{_forward.3} parent=35 // loop_header
                %s167 = sphi 0, %s171
                %p168 = scmp.ge.s32.totalorder %s167, 1
                %s172 = sphi %s161, %s161
                %s173 = sphi %s158, %s158
              $region39: #{_forward.3} parent=35 // loop_header_branch
                %170 = sbr.rel (%p168) target = $region43
              $region40: #{_forward.3} parent=35 // loop_body
                %v174 = vld [vmem:[%s172] sm:$0xff]
                %175 = vst [vmem:[%s173] sm:$0xff] %v174
                %v176 = vld [vmem:[%s172 + $0x8] sm:$0xff]
                %177 = vst [vmem:[%s173 + $0x8] sm:$0xff] %v176
                %v178 = vld [vmem:[%s172 + $0x20] sm:$0xff]
                %179 = vst [vmem:[%s173 + $0x10] sm:$0xff] %v178
                %v180 = vld [vmem:[%s172 + $0x28] sm:$0xff]
                %181 = vst [vmem:[%s173 + $0x18] sm:$0xff] %v180
              $region41: #{_forward.3} parent=35 // loop_footer
                %s171 = sadd.s32 1, %s167
              $region42: #{_forward.3} parent=35 // loop_footer_branch
                %166 = sbr.rel target = $region38
              $region43: #{_forward.3} parent=35 // loop_exit
                _
            $region36: #{_forward.3} parent=31 // pred_fallthru
              _
            // Predicated region
            $region44: #{_forward.3} parent=31 // pred_check
              _
            $region45: #{_forward.3} parent=31 // pred_check_branch
              %183 = sbr.rel target = $region47
            $region46: #{_forward.3} parent=31 // pred_region
              _
            $region47: #{_forward.3} parent=31 // pred_fallthru
              _
          $region32: #{_forward.3} parent=27 // pred_fallthru
            _
          %184 = vnop
        $region28: #{_forward.3} parent=23 // pred_fallthru
          _
      $region24: #{_forward.3} parent=5 // pred_fallthru
        _
      %p185 = scmp.le.s32.totalorder 1, %s11
      %p186 = scmp.lt.s32.totalorder %s11, 3
      %p187 = pnand %p185, %p186
      %p188 = pneg %p187
      // Predicated region
      $region48: #{_forward.3} parent=5 // pred_check
        _
      $region49: #{_forward.3} parent=5 // pred_check_branch
        %190 = sbr.rel (%p187) target = $region51
      $region50: #{_forward.3} parent=5 // pred_region
        %s191 = ssub.s32 %s11, 1
        // Predicated region
        $region52: #{_forward.3} parent=50 // pred_check
          %p192 = pneg %p32
        $region53: #{_forward.3} parent=50 // pred_check_branch
          %194 = sbr.rel (%p192) target = $region55
        $region54: #{_forward.3} parent=50 // pred_region
          %196 = dma.done [#allocation3], 192
        $region55: #{_forward.3} parent=50 // pred_fallthru
          _
        %s197 = sand.u32 %s45, 1
        %s198 = sand.u32 %s45, 1
        %s199 = smul.addr %s198, 32
        %s200 = scalar_lea.vmem [#allocation4], %s199
        // Predicated region
        $region56: #{_forward.3} parent=50 // pred_check
          %p201 = pneg %p58
        $region57: #{_forward.3} parent=50 // pred_check_branch
          %203 = sbr.rel (%p201) target = $region59
        $region58: #{_forward.3} parent=50 // pred_region
          _
        $region59: #{_forward.3} parent=50 // pred_fallthru
          _
        // Predicated region
        $region60: #{_forward.3} parent=50 // pred_check
          %p204 = pneg %p79
        $region61: #{_forward.3} parent=50 // pred_check_branch
          %206 = sbr.rel (%p204) target = $region63
        $region62: #{_forward.3} parent=50 // pred_region
          %208 = dma.done [#allocation6], 384
        $region63: #{_forward.3} parent=50 // pred_fallthru
          _
        %p209 = pneg %p32
        %p210 = pneg %p29
        %s211 = sand.u32 %s45, 1
        %s212 = sand.u32 %s45, 1
        %s213 = smul.addr %s212, 32
        %s214 = scalar_lea.vmem [#allocation4], %s213
        %p215 = pneg %p58
        %p216 = pneg %p55
        %p217 = pneg %p79
        %p218 = pneg %p76
        %p219 = pneg %p105
        %p220 = pneg %p102
        %s221 = sand.u32 %s92, 1
        %s222 = sand.u32 %s92, 1
        %s223 = smul.addr %s222, 48
        %s224 = scalar_lea.vmem [#allocation7], %s223
        %s225 = smul.u32 4, %s16
        %s226 = smul.u32 4, %s16
        %v228 = vld [vmem:[#allocation2] sm:$0xf]
        %v229 = vld [vmem:[#allocation2 + $0x4] sm:$0xf]
        %v230 = vld [vmem:[#allocation2 + $0x8] sm:$0xf]
        %v231 = vld [vmem:[%s200] sm:$0xff]
        %v232 = vld [vmem:[%s200 + $0x8] sm:$0xff]
        %v233 = vld [vmem:[%s200 + $0x10] sm:$0xff]
        %v234 = vld [vmem:[%s200 + $0x18] sm:$0xff]
        %v235 = vld [vmem:[#allocation5] sm:$0xff]
        %v236 = vld [vmem:[#allocation5 + $0x8] sm:$0xff]
        %v237 = vld [vmem:[#allocation5 + $0x10] sm:$0xff]
        %239 = vset.pattern.permute.xlu0 0
        %240 = vperm.xlu0 %239, %v235
        %v241 = vpop.permute.xlu0 %240
        %244 = vset.pattern.permute.xlu0 0
        %245 = vperm.xlu0 %244, %v236
        %v246 = vpop.permute.xlu0 %245
        %249 = vset.pattern.permute.xlu0 0
        %250 = vperm.xlu0 %249, %v237
        %v251 = vpop.permute.xlu0 %250
        %v256 = vunpack.c.l.b16 %v228
        %v257 = vunpack.c.l.b16 %v229
        %v258 = vunpack.c.l.b16 %v230
        %v259 = vpack.c.b16 %v257, %v256
        %v260 = vpack.c.b16 %v258, %v258
        %v265 = vunpack.c.l.b16 %v231
        %v266 = vunpack.c.h.b16 %v231
        %v267 = vunpack.c.l.b16 %v232
        %v268 = vunpack.c.h.b16 %v232
        %v269 = vunpack.c.l.b16 %v233
        %v270 = vunpack.c.h.b16 %v233
        %v271 = vunpack.c.l.b16 %v234
        %v272 = vunpack.c.h.b16 %v234
        %v273 = vpack.c.b16 %v269, %v265
        %v274 = vpack.c.b16 %v270, %v266
        %v275 = vpack.c.b16 %v271, %v267
        %v276 = vpack.c.b16 %v272, %v268
        %vm281 = vcmask 130048
        %v283 = vsel %vm281, %v259, 0
        %v286 = vsel %vm281, %v260, 0
        %288 = vmatpush.bf16.msra.mxu0 0
        %289 = vmatpush.bf16.msra.mxu0 0
        %290 = vmatpush.bf16.msra.mxu0 0
        %291 = vmatpush.bf16.msra.mxu0 0
        %292 = vmatpush.bf16.msra.mxu0 0
        %293 = vmatpush.bf16.msra.mxu0 0
        %294 = vmatpush.bf16.msra.mxu0 0
        %295 = vmatpush.bf16.msra.mxu0 %v273
        %296 = vmatmul.bf16.gmra.mxu0 %v283
        %v297 = vpop.f32.mrf.mxu0
        %v298 = vadd.f32 %v241, %v297
        %v299 = vpop.f32.mrf.mxu0
        %v300 = vadd.f32 %v246, %v299
        %301 = vmatmul.bf16.gmra.mxu0 %v286
        %v302 = vpop.f32.mrf.mxu0
        %v303 = vadd.f32 %v251, %v302
        %v304 = vpop.f32.mrf.mxu0
        %305 = vdwg.mxu0
        %306 = vmatpush.bf16.msra.mxu0 0
        %307 = vmatpush.bf16.msra.mxu0 0
        %308 = vmatpush.bf16.msra.mxu0 0
        %309 = vmatpush.bf16.msra.mxu0 0
        %310 = vmatpush.bf16.msra.mxu0 0
        %311 = vmatpush.bf16.msra.mxu0 0
        %312 = vmatpush.bf16.msra.mxu0 0
        %313 = vmatpush.bf16.msra.mxu0 %v274
        %314 = vmatmul.bf16.gmra.mxu0 %v283
        %v315 = vpop.f32.mrf.mxu0
        %v316 = vadd.f32 %v241, %v315
        %v317 = vpop.f32.mrf.mxu0
        %v318 = vadd.f32 %v246, %v317
        %319 = vmatmul.bf16.gmra.mxu0 %v286
        %v320 = vpop.f32.mrf.mxu0
        %v321 = vadd.f32 %v251, %v320
        %v322 = vpop.f32.mrf.mxu0
        %323 = vdwg.mxu0
        %324 = vmatpush.bf16.msra.mxu0 0
        %325 = vmatpush.bf16.msra.mxu0 0
        %326 = vmatpush.bf16.msra.mxu0 0
        %327 = vmatpush.bf16.msra.mxu0 0
        %328 = vmatpush.bf16.msra.mxu0 0
        %329 = vmatpush.bf16.msra.mxu0 0
        %330 = vmatpush.bf16.msra.mxu0 0
        %331 = vmatpush.bf16.msra.mxu0 %v275
        %332 = vmatmul.bf16.gmra.mxu0 %v283
        %v333 = vpop.f32.mrf.mxu0
        %v334 = vadd.f32 %v241, %v333
        %v335 = vpop.f32.mrf.mxu0
        %v336 = vadd.f32 %v246, %v335
        %337 = vmatmul.bf16.gmra.mxu0 %v286
        %v338 = vpop.f32.mrf.mxu0
        %v339 = vadd.f32 %v251, %v338
        %v340 = vpop.f32.mrf.mxu0
        %341 = vdwg.mxu0
        %342 = vmatpush.bf16.msra.mxu0 0
        %343 = vmatpush.bf16.msra.mxu0 0
        %344 = vmatpush.bf16.msra.mxu0 0
        %345 = vmatpush.bf16.msra.mxu0 0
        %346 = vmatpush.bf16.msra.mxu0 0
        %347 = vmatpush.bf16.msra.mxu0 0
        %348 = vmatpush.bf16.msra.mxu0 0
        %349 = vmatpush.bf16.msra.mxu0 %v276
        %350 = vmatmul.bf16.gmra.mxu0 %v283
        %v351 = vpop.f32.mrf.mxu0
        %v352 = vadd.f32 %v241, %v351
        %v353 = vpop.f32.mrf.mxu0
        %v354 = vadd.f32 %v246, %v353
        %355 = vmatmul.bf16.gmra.mxu0 %v286
        %v356 = vpop.f32.mrf.mxu0
        %v357 = vadd.f32 %v251, %v356
        %v358 = vpop.f32.mrf.mxu0
        %359 = vdwg.mxu0
        %v360 = vmax.f32 %v298, 0.0
        %v361 = vmax.f32 %v316, 0.0
        %v362 = vmax.f32 %v334, 0.0
        %v363 = vmax.f32 %v352, 0.0
        %v364 = vmax.f32 %v300, 0.0
        %v365 = vmax.f32 %v318, 0.0
        %v366 = vmax.f32 %v336, 0.0
        %v367 = vmax.f32 %v354, 0.0
        %v368 = vmax.f32 %v303, 0.0
        %v369 = vmax.f32 %v321, 0.0
        %v370 = vmax.f32 %v339, 0.0
        %v371 = vmax.f32 %v357, 0.0
        %v372 = vpack.c.bf16 %v361, %v360
        %v373 = vpack.c.bf16 %v363, %v362
        %v374 = vpack.c.bf16 %v365, %v364
        %v375 = vpack.c.bf16 %v367, %v366
        %v376 = vpack.c.bf16 %v369, %v368
        %v377 = vpack.c.bf16 %v371, %v370
        %378 = vst [vmem:[%s224] sm:$0xff] %v372
        %379 = vst [vmem:[%s224 + $0x8] sm:$0xff] %v373
        %380 = vst [vmem:[%s224 + $0x10] sm:$0xff] %v374
        %381 = vst [vmem:[%s224 + $0x18] sm:$0xff] %v375
        %382 = vst [vmem:[%s224 + $0x20] sm:$0xff] %v376
        %383 = vst [vmem:[%s224 + $0x28] sm:$0xff] %v377
        %s384 = sand.u32 %s92, 1
        %s385 = sand.u32 %s92, 1
        %s386 = smul.addr %s385, 48
        %s387 = scalar_lea.vmem [#allocation7], %s386
        // Predicated region
        $region64: #{_forward.3} parent=50 // pred_check
          %p388 = pneg %p102
        $region65: #{_forward.3} parent=50 // pred_check_branch
          %390 = sbr.rel (%p388) target = $region67
        $region66: #{_forward.3} parent=50 // pred_region
          %s391 = smul.u32 4, %s16
          %s392 = smul.addr %s391, 4
          %s393 = scalar_lea.vmem %s3, %s392
          // Predicated region
          $region68: #{_forward.3} parent=66 // pred_check
            _
          $region69: #{_forward.3} parent=66 // pred_check_branch
            %395 = sbr.rel (0) target = $region71
          $region70: #{_forward.3} parent=66 // pred_region
            // Predicated region
            $region72: #{_forward.3} parent=70 // pred_check
              _
            $region73: #{_forward.3} parent=70 // pred_check_branch
              %397 = sbr.rel (0) target = $region75
            $region74: #{_forward.3} parent=70 // pred_region
              loop: start=0, step=1, limit=1
              $region76: #{_forward.3} parent=74 // loop_pre_header
                _
              $region77: #{_forward.3} parent=74 // loop_header
                %s399 = sphi 0, %s403
                %p400 = scmp.ge.s32.totalorder %s399, 1
                %s404 = sphi %s387, %s387
                %s405 = sphi %s393, %s393
              $region78: #{_forward.3} parent=74 // loop_header_branch
                %402 = sbr.rel (%p400) target = $region82
              $region79: #{_forward.3} parent=74 // loop_body
                %v406 = vld [vmem:[%s404] sm:$0xff]
                %407 = vst [vmem:[%s405] sm:$0xff] %v406
                %v408 = vld [vmem:[%s404 + $0x8] sm:$0xff]
                %409 = vst [vmem:[%s405 + $0x8] sm:$0xff] %v408
                %v410 = vld [vmem:[%s404 + $0x10] sm:$0xff]
                %411 = vst [vmem:[%s405 + $0x20] sm:$0xff] %v410
                %v412 = vld [vmem:[%s404 + $0x18] sm:$0xff]
                %413 = vst [vmem:[%s405 + $0x28] sm:$0xff] %v412
                %v414 = vld [vmem:[%s404 + $0x20] sm:$0xff]
                %415 = vst [vmem:[%s405 + $0x40] sm:$0xff] %v414
                %v416 = vld [vmem:[%s404 + $0x28] sm:$0xff]
                %417 = vst [vmem:[%s405 + $0x48] sm:$0xff] %v416
              $region80: #{_forward.3} parent=74 // loop_footer
                %s403 = sadd.s32 1, %s399
              $region81: #{_forward.3} parent=74 // loop_footer_branch
                %398 = sbr.rel target = $region77
              $region82: #{_forward.3} parent=74 // loop_exit
                _
            $region75: #{_forward.3} parent=70 // pred_fallthru
              _
            // Predicated region
            $region83: #{_forward.3} parent=70 // pred_check
              _
            $region84: #{_forward.3} parent=70 // pred_check_branch
              %419 = sbr.rel target = $region86
            $region85: #{_forward.3} parent=70 // pred_region
              _
            $region86: #{_forward.3} parent=70 // pred_fallthru
              _
          $region71: #{_forward.3} parent=66 // pred_fallthru
            _
          %420 = vnop
        $region67: #{_forward.3} parent=50 // pred_fallthru
          _
      $region51: #{_forward.3} parent=5 // pred_fallthru
        _
      %p421 = scmp.le.s32.totalorder 2, %s11
      // Predicated region
      $region87: #{_forward.3} parent=5 // pred_check
        %p422 = pneg %p421
      $region88: #{_forward.3} parent=5 // pred_check_branch
        %424 = sbr.rel (%p422) target = $region90
      $region89: #{_forward.3} parent=5 // pred_region
        %s425 = ssub.s32 %s11, 2
        // Predicated region
        $region91: #{_forward.3} parent=89 // pred_check
          %p426 = pneg %p108
        $region92: #{_forward.3} parent=89 // pred_check_branch
          %428 = sbr.rel (%p426) target = $region94
        $region93: #{_forward.3} parent=89 // pred_region
          %s429 = sand.u32 %s93, 1
          %s430 = sand.u32 %s93, 1
          %s431 = smul.addr %s430, 48
          %s432 = scalar_lea.vmem [#allocation7], %s431
        $region94: #{_forward.3} parent=89 // pred_fallthru
          _
      $region90: #{_forward.3} parent=5 // pred_fallthru
        _
    $region6: #{_forward.3} parent=1 // loop_footer
      %s15 = sadd.s32 1, %s11
    $region7: #{_forward.3} parent=1 // loop_footer_branch
      %10 = sbr.rel target = $region3
    $region8: #{_forward.3} parent=1 // loop_exit
      _
    %433 = vsyncpa [#allocation3], 1
    %s434 = scalar_lea.sflag [#allocation3], 1
    %435 = vsyncpa %s434, 1
    %436 = vsyncpa [#allocation6], 1

// kernel: _forward.4
$region0: #{_forward.4}
  #allocation0 [shape = 'u32[]', space=smem, size = 0x4, offset = 0x4, fixed_abs, tag = 'smem constant byte address 0x4 - core index']
  #allocation1 [shape = 'u32[72,128]{1,0:T(1,128)}', space=vmem, size = 0x9000, scoped, tag = 'internal scratch']
  %s0 = inlined_call_operand.vmem [shape: bf16[24,216], index: 0, kind: input, shape index: {}]
  %s1 = inlined_call_operand.vmem [shape: bf16[216,1024], index: 1, kind: input, shape index: {}]
  %s2 = inlined_call_operand.vmem [shape: f32[24,1], index: 2, kind: input, shape index: {}]
  %s3 = inlined_call_operand.vmem [shape: bf16[24,1024], index: 3, kind: output, shape index: {}]
  %s4 = sld [smem:[#allocation0]]
  $region87: #{_forward.4} parent=0
    _
  %s6 = ssub.s32 1, %s4
  %s7 = scalar_select 0, %s6, %s4
  $region1: #{_forward.4} parent=0
    #allocation2 [shape = 'u8[442368]{0}', space=vmem, size = 0x6c000, scoped, tag = 'input window, operand 1']
    #allocation3 [shape = 'u8[49152]{0}', space=vmem, size = 0xc000, scoped, tag = 'output window, operand 0']
    loop: start=0, step=1, limit=4
    $region2: #{_forward.4} parent=1 // loop_pre_header
      _
    $region3: #{_forward.4} parent=1 // loop_header
      %s9 = sphi 0, %s13
      %p10 = scmp.ge.s32.totalorder %s9, 4
      %s17 = sphi 0, %s17
      %s19 = sphi 0, %s17
      %s20 = sphi 0, %s19
      %s34 = sphi 0, %s20
      %s40 = sphi 0, %s42
      %s43 = sphi 0, %s40
      %s44 = sphi 0, %s43
      %s60 = sphi 0, %s44
      %s64 = sphi 0, %s64
      %s66 = sphi 0, %s64
      %s67 = sphi 0, %s66
      %s81 = sphi 0, %s67
      %s87 = sphi 0, %s89
      %s90 = sphi 0, %s87
      %s91 = sphi 0, %s90
      %s107 = sphi 0, %s91
    $region4: #{_forward.4} parent=1 // loop_header_branch
      %12 = sbr.rel (%p10) target = $region8
    $region5: #{_forward.4} parent=1 // loop_body
      %s14 = ssub.s32 %s9, 1
      %s15 = ssub.s32 %s9, 2
      %s16 = sadd.s32 %s9, 1
      %s18 = sadd.s32 %s17, 1
      %p21 = scmp.eq.s32.totalorder %s9, 1
      %p22 = scmp.ne.s32.totalorder %s17, %s19
      %p23 = scmp.eq.s32.totalorder %s9, 0
      %p24 = por %p22, %p23
      %p25 = scmp.ne.s32.totalorder %s17, %s19
      %p26 = scmp.eq.s32.totalorder %s14, 1
      %p27 = por %p25, %p26
      %p28 = scmp.ne.s32.totalorder %s19, %s20
      %p29 = scmp.eq.s32.totalorder %s14, 0
      %p30 = por %p28, %p29
      %p31 = scmp.ne.s32.totalorder %s19, %s20
      %p32 = scmp.eq.s32.totalorder %s15, 1
      %p33 = por %p31, %p32
      %p35 = scmp.ne.s32.totalorder %s20, %s34
      %p36 = scmp.eq.s32.totalorder %s15, 0
      %p37 = por %p35, %p36
      %s38 = ssub.s32 %s9, %s16
      %p39 = scmp.eq.s32.totalorder %s38, 0
      %s41 = sadd.s32 %s40, 1
      %s42 = scalar_select %p39, %s40, %s41
      %p45 = pneg %p39
      %p46 = scmp.eq.s32.totalorder %s9, 1
      %p47 = por %p45, %p46
      %p48 = scmp.ne.s32.totalorder %s40, %s43
      %p49 = scmp.eq.s32.totalorder %s9, 0
      %p50 = por %p48, %p49
      %p51 = scmp.ne.s32.totalorder %s40, %s43
      %p52 = scmp.eq.s32.totalorder %s14, 1
      %p53 = por %p51, %p52
      %p54 = scmp.ne.s32.totalorder %s43, %s44
      %p55 = scmp.eq.s32.totalorder %s14, 0
      %p56 = por %p54, %p55
      %p57 = scmp.ne.s32.totalorder %s43, %s44
      %p58 = scmp.eq.s32.totalorder %s15, 1
      %p59 = por %p57, %p58
      %p61 = scmp.ne.s32.totalorder %s44, %s60
      %p62 = scmp.eq.s32.totalorder %s15, 0
      %p63 = por %p61, %p62
      %s65 = sadd.s32 %s64, 1
      %p68 = scmp.eq.s32.totalorder %s9, 1
      %p69 = scmp.ne.s32.totalorder %s64, %s66
      %p70 = scmp.eq.s32.totalorder %s9, 0
      %p71 = por %p69, %p70
      %p72 = scmp.ne.s32.totalorder %s64, %s66
      %p73 = scmp.eq.s32.totalorder %s14, 1
      %p74 = por %p72, %p73
      %p75 = scmp.ne.s32.totalorder %s66, %s67
      %p76 = scmp.eq.s32.totalorder %s14, 0
      %p77 = por %p75, %p76
      %p78 = scmp.ne.s32.totalorder %s66, %s67
      %p79 = scmp.eq.s32.totalorder %s15, 1
      %p80 = por %p78, %p79
      %p82 = scmp.ne.s32.totalorder %s67, %s81
      %p83 = scmp.eq.s32.totalorder %s15, 0
      %p84 = por %p82, %p83
      %s85 = ssub.s32 %s9, %s16
      %p86 = scmp.eq.s32.totalorder %s85, 0
      %s88 = sadd.s32 %s87, 1
      %s89 = scalar_select %p86, %s87, %s88
      %p92 = pneg %p86
      %p93 = scmp.eq.s32.totalorder %s9, 1
      %p94 = por %p92, %p93
      %p95 = scmp.ne.s32.totalorder %s87, %s90
      %p96 = scmp.eq.s32.totalorder %s9, 0
      %p97 = por %p95, %p96
      %p98 = scmp.ne.s32.totalorder %s87, %s90
      %p99 = scmp.eq.s32.totalorder %s14, 1
      %p100 = por %p98, %p99
      %p101 = scmp.ne.s32.totalorder %s90, %s91
      %p102 = scmp.eq.s32.totalorder %s14, 0
      %p103 = por %p101, %p102
      %p104 = scmp.ne.s32.totalorder %s90, %s91
      %p105 = scmp.eq.s32.totalorder %s15, 1
      %p106 = por %p104, %p105
      %p108 = scmp.ne.s32.totalorder %s91, %s107
      %p109 = scmp.eq.s32.totalorder %s15, 0
      %p110 = por %p108, %p109
      %p111 = scmp.le.s32.totalorder 1, %s9
      %p112 = scmp.lt.s32.totalorder %s9, 3
      %p113 = pnand %p111, %p112
      %p114 = pneg %p113
      // Predicated region
      $region9: #{_forward.4} parent=5 // pred_check
        _
      $region10: #{_forward.4} parent=5 // pred_check_branch
        %116 = sbr.rel (%p113) target = $region12
      $region11: #{_forward.4} parent=5 // pred_region
        %s117 = ssub.s32 %s9, 1
        // Predicated region
        $region13: #{_forward.4} parent=11 // pred_check
          %p118 = pneg %p30
        $region14: #{_forward.4} parent=11 // pred_check_branch
          %120 = sbr.rel (%p118) target = $region16
        $region15: #{_forward.4} parent=11 // pred_region
          _
        $region16: #{_forward.4} parent=11 // pred_fallthru
          _
        // Predicated region
        $region17: #{_forward.4} parent=11 // pred_check
          %p121 = pneg %p77
        $region18: #{_forward.4} parent=11 // pred_check_branch
          %123 = sbr.rel (%p121) target = $region20
        $region19: #{_forward.4} parent=11 // pred_region
          _
        $region20: #{_forward.4} parent=11 // pred_fallthru
          _
      $region12: #{_forward.4} parent=5 // pred_fallthru
        _
      %p124 = scmp.lt.s32.totalorder %s9, 2
      // Predicated region
      $region21: #{_forward.4} parent=5 // pred_check
        %p125 = pneg %p124
      $region22: #{_forward.4} parent=5 // pred_check_branch
        %127 = sbr.rel (%p125) target = $region24
      $region23: #{_forward.4} parent=5 // pred_region
        // Predicated region
        $region25: #{_forward.4} parent=23 // pred_check
          %p128 = pneg %p50
        $region26: #{_forward.4} parent=23 // pred_check_branch
          %130 = sbr.rel (%p128) target = $region28
        $region27: #{_forward.4} parent=23 // pred_region
          %s131 = sand.u32 %s40, 1
          %s132 = sand.u32 %s40, 1
          %s133 = smul.addr %s132, 432
          %s134 = scalar_lea.vmem [#allocation2], %s133
          %s135 = smul.u32 4, %s9
          %s136 = smul.addr %s135, 4
          %s137 = scalar_lea.vmem %s1, %s136
          // Predicated region
          $region29: #{_forward.4} parent=27 // pred_check
            _
          $region30: #{_forward.4} parent=27 // pred_check_branch
            %139 = sbr.rel (0) target = $region32
          $region31: #{_forward.4} parent=27 // pred_region
            // Predicated region
            $region33: #{_forward.4} parent=31 // pred_check
              _
            $region34: #{_forward.4} parent=31 // pred_check_branch
              %141 = sbr.rel (0) target = $region36
            $region35: #{_forward.4} parent=31 // pred_region
              loop: start=0, step=1, limit=1
              $region37: #{_forward.4} parent=35 // loop_pre_header
                _
              $region38: #{_forward.4} parent=35 // loop_header
                %s143 = sphi 0, %s147
                %p144 = scmp.ge.s32.totalorder %s143, 1
                %s148 = sphi %s137, %s137
                %s149 = sphi %s134, %s134
              $region39: #{_forward.4} parent=35 // loop_header_branch
                %146 = sbr.rel (%p144) target = $region43
              $region40: #{_forward.4} parent=35 // loop_body
                %v150 = vld [vmem:[%s148] sm:$0xff]
                %151 = vst [vmem:[%s149] sm:$0xff] %v150
                %v152 = vld [vmem:[%s148 + $0x8] sm:$0xff]
                %153 = vst [vmem:[%s149 + $0x8] sm:$0xff] %v152
                %v154 = vld [vmem:[%s148 + $0x20] sm:$0xff]
                %155 = vst [vmem:[%s149 + $0x10] sm:$0xff] %v154
                %v156 = vld [vmem:[%s148 + $0x28] sm:$0xff]
                %157 = vst [vmem:[%s149 + $0x18] sm:$0xff] %v156
                %v158 = vld [vmem:[%s148 + $0x40] sm:$0xff]
                %159 = vst [vmem:[%s149 + $0x20] sm:$0xff] %v158
                %v160 = vld [vmem:[%s148 + $0x48] sm:$0xff]
                %161 = vst [vmem:[%s149 + $0x28] sm:$0xff] %v160
                %v162 = vld [vmem:[%s148 + $0x60] sm:$0xff]
                %163 = vst [vmem:[%s149 + $0x30] sm:$0xff] %v162
                %v164 = vld [vmem:[%s148 + $0x68] sm:$0xff]
                %165 = vst [vmem:[%s149 + $0x38] sm:$0xff] %v164
                %v166 = vld [vmem:[%s148 + $0x80] sm:$0xff]
                %167 = vst [vmem:[%s149 + $0x40] sm:$0xff] %v166
                %v168 = vld [vmem:[%s148 + $0x88] sm:$0xff]
                %169 = vst [vmem:[%s149 + $0x48] sm:$0xff] %v168
                %v170 = vld [vmem:[%s148 + $0xa0] sm:$0xff]
                %171 = vst [vmem:[%s149 + $0x50] sm:$0xff] %v170
                %v172 = vld [vmem:[%s148 + $0xa8] sm:$0xff]
                %173 = vst [vmem:[%s149 + $0x58] sm:$0xff] %v172
                %v174 = vld [vmem:[%s148 + $0xc0] sm:$0xff]
                %175 = vst [vmem:[%s149 + $0x60] sm:$0xff] %v174
                %v176 = vld [vmem:[%s148 + $0xc8] sm:$0xff]
                %177 = vst [vmem:[%s149 + $0x68] sm:$0xff] %v176
                %v178 = vld [vmem:[%s148 + $0xe0] sm:$0xff]
                %179 = vst [vmem:[%s149 + $0x70] sm:$0xff] %v178
                %v180 = vld [vmem:[%s148 + $0xe8] sm:$0xff]
                %181 = vst [vmem:[%s149 + $0x78] sm:$0xff] %v180
                %v182 = vld [vmem:[%s148 + $0x100] sm:$0xff]
                %183 = vst [vmem:[%s149 + $0x80] sm:$0xff] %v182
                %v184 = vld [vmem:[%s148 + $0x108] sm:$0xff]
                %185 = vst [vmem:[%s149 + $0x88] sm:$0xff] %v184
                %v186 = vld [vmem:[%s148 + $0x120] sm:$0xff]
                %187 = vst [vmem:[%s149 + $0x90] sm:$0xff] %v186
                %v188 = vld [vmem:[%s148 + $0x128] sm:$0xff]
                %189 = vst [vmem:[%s149 + $0x98] sm:$0xff] %v188
                %v190 = vld [vmem:[%s148 + $0x140] sm:$0xff]
                %191 = vst [vmem:[%s149 + $0xa0] sm:$0xff] %v190
                %v192 = vld [vmem:[%s148 + $0x148] sm:$0xff]
                %193 = vst [vmem:[%s149 + $0xa8] sm:$0xff] %v192
                %v194 = vld [vmem:[%s148 + $0x160] sm:$0xff]
                %195 = vst [vmem:[%s149 + $0xb0] sm:$0xff] %v194
                %v196 = vld [vmem:[%s148 + $0x168] sm:$0xff]
                %197 = vst [vmem:[%s149 + $0xb8] sm:$0xff] %v196
                %v198 = vld [vmem:[%s148 + $0x180] sm:$0xff]
                %199 = vst [vmem:[%s149 + $0xc0] sm:$0xff] %v198
                %v200 = vld [vmem:[%s148 + $0x188] sm:$0xff]
                %201 = vst [vmem:[%s149 + $0xc8] sm:$0xff] %v200
                %v202 = vld [vmem:[%s148 + $0x1a0] sm:$0xff]
                %203 = vst [vmem:[%s149 + $0xd0] sm:$0xff] %v202
                %v204 = vld [vmem:[%s148 + $0x1a8] sm:$0xff]
                %205 = vst [vmem:[%s149 + $0xd8] sm:$0xff] %v204
                %v206 = vld [vmem:[%s148 + $0x1c0] sm:$0xff]
                %207 = vst [vmem:[%s149 + $0xe0] sm:$0xff] %v206
                %v208 = vld [vmem:[%s148 + $0x1c8] sm:$0xff]
                %209 = vst [vmem:[%s149 + $0xe8] sm:$0xff] %v208
                %v210 = vld [vmem:[%s148 + $0x1e0] sm:$0xff]
                %211 = vst [vmem:[%s149 + $0xf0] sm:$0xff] %v210
                %v212 = vld [vmem:[%s148 + $0x1e8] sm:$0xff]
                %213 = vst [vmem:[%s149 + $0xf8] sm:$0xff] %v212
                %v214 = vld [vmem:[%s148 + $0x200] sm:$0xff]
                %215 = vst [vmem:[%s149 + $0x100] sm:$0xff] %v214
                %v216 = vld [vmem:[%s148 + $0x208] sm:$0xff]
                %217 = vst [vmem:[%s149 + $0x108] sm:$0xff] %v216
                %v218 = vld [vmem:[%s148 + $0x220] sm:$0xff]
                %219 = vst [vmem:[%s149 + $0x110] sm:$0xff] %v218
                %v220 = vld [vmem:[%s148 + $0x228] sm:$0xff]
                %221 = vst [vmem:[%s149 + $0x118] sm:$0xff] %v220
                %v222 = vld [vmem:[%s148 + $0x240] sm:$0xff]
                %223 = vst [vmem:[%s149 + $0x120] sm:$0xff] %v222
                %v224 = vld [vmem:[%s148 + $0x248] sm:$0xff]
                %225 = vst [vmem:[%s149 + $0x128] sm:$0xff] %v224
                %v226 = vld [vmem:[%s148 + $0x260] sm:$0xff]
                %227 = vst [vmem:[%s149 + $0x130] sm:$0xff] %v226
                %v228 = vld [vmem:[%s148 + $0x268] sm:$0xff]
                %229 = vst [vmem:[%s149 + $0x138] sm:$0xff] %v228
                %v230 = vld [vmem:[%s148 + $0x280] sm:$0xff]
                %231 = vst [vmem:[%s149 + $0x140] sm:$0xff] %v230
                %v232 = vld [vmem:[%s148 + $0x288] sm:$0xff]
                %233 = vst [vmem:[%s149 + $0x148] sm:$0xff] %v232
                %v234 = vld [vmem:[%s148 + $0x2a0] sm:$0xff]
                %235 = vst [vmem:[%s149 + $0x150] sm:$0xff] %v234
                %v236 = vld [vmem:[%s148 + $0x2a8] sm:$0xff]
                %237 = vst [vmem:[%s149 + $0x158] sm:$0xff] %v236
                %v238 = vld [vmem:[%s148 + $0x2c0] sm:$0xff]
                %239 = vst [vmem:[%s149 + $0x160] sm:$0xff] %v238
                %v240 = vld [vmem:[%s148 + $0x2c8] sm:$0xff]
                %241 = vst [vmem:[%s149 + $0x168] sm:$0xff] %v240
                %v242 = vld [vmem:[%s148 + $0x2e0] sm:$0xff]
                %243 = vst [vmem:[%s149 + $0x170] sm:$0xff] %v242
                %v244 = vld [vmem:[%s148 + $0x2e8] sm:$0xff]
                %245 = vst [vmem:[%s149 + $0x178] sm:$0xff] %v244
                %v246 = vld [vmem:[%s148 + $0x300] sm:$0xff]
                %247 = vst [vmem:[%s149 + $0x180] sm:$0xff] %v246
                %v248 = vld [vmem:[%s148 + $0x308] sm:$0xff]
                %249 = vst [vmem:[%s149 + $0x188] sm:$0xff] %v248
                %v250 = vld [vmem:[%s148 + $0x320] sm:$0xff]
                %251 = vst [vmem:[%s149 + $0x190] sm:$0xff] %v250
                %v252 = vld [vmem:[%s148 + $0x328] sm:$0xff]
                %253 = vst [vmem:[%s149 + $0x198] sm:$0xff] %v252
                %v254 = vld [vmem:[%s148 + $0x340] sm:$0xff]
                %255 = vst [vmem:[%s149 + $0x1a0] sm:$0xff] %v254
                %v256 = vld [vmem:[%s148 + $0x348] sm:$0xff]
                %257 = vst [vmem:[%s149 + $0x1a8] sm:$0xff] %v256
              $region41: #{_forward.4} parent=35 // loop_footer
                %s147 = sadd.s32 1, %s143
              $region42: #{_forward.4} parent=35 // loop_footer_branch
                %142 = sbr.rel target = $region38
              $region43: #{_forward.4} parent=35 // loop_exit
                _
            $region36: #{_forward.4} parent=31 // pred_fallthru
              _
            // Predicated region
            $region44: #{_forward.4} parent=31 // pred_check
              _
            $region45: #{_forward.4} parent=31 // pred_check_branch
              %259 = sbr.rel target = $region47
            $region46: #{_forward.4} parent=31 // pred_region
              _
            $region47: #{_forward.4} parent=31 // pred_fallthru
              _
          $region32: #{_forward.4} parent=27 // pred_fallthru
            _
          %260 = vnop
        $region28: #{_forward.4} parent=23 // pred_fallthru
          _
      $region24: #{_forward.4} parent=5 // pred_fallthru
        _
      %p261 = scmp.le.s32.totalorder 1, %s9
      %p262 = scmp.lt.s32.totalorder %s9, 3
      %p263 = pnand %p261, %p262
      %p264 = pneg %p263
      // Predicated region
      $region48: #{_forward.4} parent=5 // pred_check
        _
      $region49: #{_forward.4} parent=5 // pred_check_branch
        %266 = sbr.rel (%p263) target = $region51
      $region50: #{_forward.4} parent=5 // pred_region
        %s267 = ssub.s32 %s9, 1
        %s268 = sand.u32 %s43, 1
        %s269 = sand.u32 %s43, 1
        %s270 = smul.addr %s269, 432
        %s271 = scalar_lea.vmem [#allocation2], %s270
        // Predicated region
        $region52: #{_forward.4} parent=50 // pred_check
          %p272 = pneg %p56
        $region53: #{_forward.4} parent=50 // pred_check_branch
          %274 = sbr.rel (%p272) target = $region55
        $region54: #{_forward.4} parent=50 // pred_region
          _
        $region55: #{_forward.4} parent=50 // pred_fallthru
          _
        %p275 = pneg %p30
        %p276 = pneg %p27
        %s277 = sand.u32 %s43, 1
        %s278 = sand.u32 %s43, 1
        %s279 = smul.addr %s278, 432
        %s280 = scalar_lea.vmem [#allocation2], %s279
        %p281 = pneg %p56
        %p282 = pneg %p53
        %p283 = pneg %p77
        %p284 = pneg %p74
        %p285 = pneg %p103
        %p286 = pneg %p100
        %s287 = sand.u32 %s90, 1
        %s288 = sand.u32 %s90, 1
        %s289 = smul.addr %s288, 48
        %s290 = scalar_lea.vmem [#allocation3], %s289
        %s291 = smul.u32 4, %s14
        %s292 = smul.u32 4, %s14
        %v294 = vld [vmem:[%s0] sm:$0xff]
        %v295 = vld [vmem:[%s0 + $0x8] sm:$0xff]
        %v296 = vld [vmem:[%s0 + $0x10] sm:$0xff]
        %v297 = vld [vmem:[%s271] sm:$0xff]
        %v298 = vld [vmem:[%s271 + $0x8] sm:$0xff]
        %v299 = vld [vmem:[%s271 + $0x10] sm:$0xff]
        %v300 = vld [vmem:[%s271 + $0x18] sm:$0xff]
        %v301 = vld [vmem:[%s271 + $0x20] sm:$0xff]
        %v302 = vld [vmem:[%s271 + $0x28] sm:$0xff]
        %v303 = vld [vmem:[%s271 + $0x30] sm:$0xff]
        %v304 = vld [vmem:[%s271 + $0x38] sm:$0xff]
        %v305 = vld [vmem:[%s271 + $0x40] sm:$0xff]
        %v306 = vld [vmem:[%s271 + $0x48] sm:$0xff]
        %v307 = vld [vmem:[%s271 + $0x50] sm:$0xff]
        %v308 = vld [vmem:[%s271 + $0x58] sm:$0xff]
        %v309 = vld [vmem:[%s271 + $0x60] sm:$0xff]
        %v310 = vld [vmem:[%s271 + $0x68] sm:$0xff]
        %v311 = vld [vmem:[%s271 + $0x70] sm:$0xff]
        %v312 = vld [vmem:[%s271 + $0x78] sm:$0xff]
        %v313 = vld [vmem:[%s271 + $0x80] sm:$0xff]
        %v314 = vld [vmem:[%s271 + $0x88] sm:$0xff]
        %v315 = vld [vmem:[%s271 + $0x90] sm:$0xff]
        %v316 = vld [vmem:[%s271 + $0x98] sm:$0xff]
        %v317 = vld [vmem:[%s271 + $0xa0] sm:$0xff]
        %v318 = vld [vmem:[%s271 + $0xa8] sm:$0xff]
        %v319 = vld [vmem:[%s271 + $0xb0] sm:$0xff]
        %v320 = vld [vmem:[%s271 + $0xb8] sm:$0xff]
        %v321 = vld [vmem:[%s271 + $0xc0] sm:$0xff]
        %v322 = vld [vmem:[%s271 + $0xc8] sm:$0xff]
        %v323 = vld [vmem:[%s271 + $0xd0] sm:$0xff]
        %v324 = vld [vmem:[%s271 + $0xd8] sm:$0xff]
        %v325 = vld [vmem:[%s271 + $0xe0] sm:$0xff]
        %v326 = vld [vmem:[%s271 + $0xe8] sm:$0xff]
        %v327 = vld [vmem:[%s271 + $0xf0] sm:$0xff]
        %v328 = vld [vmem:[%s271 + $0xf8] sm:$0xff]
        %v329 = vld [vmem:[%s271 + $0x100] sm:$0xff]
        %v330 = vld [vmem:[%s271 + $0x108] sm:$0xff]
        %v331 = vld [vmem:[%s271 + $0x110] sm:$0xff]
        %v332 = vld [vmem:[%s271 + $0x118] sm:$0xff]
        %v333 = vld [vmem:[%s271 + $0x120] sm:$0xff]
        %v334 = vld [vmem:[%s271 + $0x128] sm:$0xff]
        %v335 = vld [vmem:[%s271 + $0x130] sm:$0xff]
        %v336 = vld [vmem:[%s271 + $0x138] sm:$0xff]
        %v337 = vld [vmem:[%s271 + $0x140] sm:$0xff]
        %v338 = vld [vmem:[%s271 + $0x148] sm:$0xff]
        %v339 = vld [vmem:[%s271 + $0x150] sm:$0xff]
        %v340 = vld [vmem:[%s271 + $0x158] sm:$0xff]
        %v341 = vld [vmem:[%s271 + $0x160] sm:$0xff]
        %v342 = vld [vmem:[%s271 + $0x168] sm:$0xff]
        %v343 = vld [vmem:[%s271 + $0x170] sm:$0xff]
        %v344 = vld [vmem:[%s271 + $0x178] sm:$0xff]
        %v345 = vld [vmem:[%s271 + $0x180] sm:$0xff]
        %v346 = vld [vmem:[%s271 + $0x188] sm:$0xff]
        %v347 = vld [vmem:[%s271 + $0x190] sm:$0xff]
        %v348 = vld [vmem:[%s271 + $0x198] sm:$0xff]
        %v349 = vld [vmem:[%s271 + $0x1a0] sm:$0xff]
        %v350 = vld [vmem:[%s271 + $0x1a8] sm:$0xff]
        %v351 = vld [vmem:[%s2] sm:$0xff]
        %v352 = vld [vmem:[%s2 + $0x8] sm:$0xff]
        %v353 = vld [vmem:[%s2 + $0x10] sm:$0xff]
        %355 = vset.pattern.permute.xlu0 0
        %356 = vperm.xlu0 %355, %v351
        %v357 = vpop.permute.xlu0 %356
        %360 = vset.pattern.permute.xlu0 0
        %361 = vperm.xlu0 %360, %v352
        %v362 = vpop.permute.xlu0 %361
        %365 = vset.pattern.permute.xlu0 0
        %366 = vperm.xlu0 %365, %v353
        %v367 = vpop.permute.xlu0 %366
        %v372 = vunpack.c.l.b16 %v294
        %v373 = vunpack.c.h.b16 %v294
        %v374 = vunpack.c.l.b16 %v295
        %v375 = vunpack.c.h.b16 %v295
        %v376 = vunpack.c.l.b16 %v296
        %v377 = vunpack.c.h.b16 %v296
        %v378 = vpack.c.b16 %v374, %v372
        %v379 = vpack.c.b16 %v375, %v373
        %v380 = vpack.c.b16 %v376, %v376
        %v381 = vpack.c.b16 %v377, %v377
        %v438 = vunpack.c.l.b16 %v297
        %v439 = vunpack.c.h.b16 %v297
        %v440 = vunpack.c.l.b16 %v298
        %v441 = vunpack.c.h.b16 %v298
        %v442 = vunpack.c.l.b16 %v299
        %v443 = vunpack.c.h.b16 %v299
        %v444 = vunpack.c.l.b16 %v300
        %v445 = vunpack.c.h.b16 %v300
        %v446 = vunpack.c.l.b16 %v301
        %v447 = vunpack.c.h.b16 %v301
        %v448 = vunpack.c.l.b16 %v302
        %v449 = vunpack.c.h.b16 %v302
        %v450 = vunpack.c.l.b16 %v303
        %v451 = vunpack.c.h.b16 %v303
        %v452 = vunpack.c.l.b16 %v304
        %v453 = vunpack.c.h.b16 %v304
        %v454 = vunpack.c.l.b16 %v305
        %v455 = vunpack.c.h.b16 %v305
        %v456 = vunpack.c.l.b16 %v306
        %v457 = vunpack.c.h.b16 %v306
        %v458 = vunpack.c.l.b16 %v307
        %v459 = vunpack.c.h.b16 %v307
        %v460 = vunpack.c.l.b16 %v308
        %v461 = vunpack.c.h.b16 %v308
        %v462 = vunpack.c.l.b16 %v309
        %v463 = vunpack.c.h.b16 %v309
        %v464 = vunpack.c.l.b16 %v310
        %v465 = vunpack.c.h.b16 %v310
        %v466 = vunpack.c.l.b16 %v311
        %v467 = vunpack.c.h.b16 %v311
        %v468 = vunpack.c.l.b16 %v312
        %v469 = vunpack.c.h.b16 %v312
        %v470 = vunpack.c.l.b16 %v313
        %v471 = vunpack.c.h.b16 %v313
        %v472 = vunpack.c.l.b16 %v314
        %v473 = vunpack.c.h.b16 %v314
        %v474 = vunpack.c.l.b16 %v315
        %v475 = vunpack.c.h.b16 %v315
        %v476 = vunpack.c.l.b16 %v316
        %v477 = vunpack.c.h.b16 %v316
        %v478 = vunpack.c.l.b16 %v317
        %v479 = vunpack.c.h.b16 %v317
        %v480 = vunpack.c.l.b16 %v318
        %v481 = vunpack.c.h.b16 %v318
        %v482 = vunpack.c.l.b16 %v319
        %v483 = vunpack.c.h.b16 %v319
        %v484 = vunpack.c.l.b16 %v320
        %v485 = vunpack.c.h.b16 %v320
        %v486 = vunpack.c.l.b16 %v321
        %v487 = vunpack.c.h.b16 %v321
        %v488 = vunpack.c.l.b16 %v322
        %v489 = vunpack.c.h.b16 %v322
        %v490 = vunpack.c.l.b16 %v323
        %v491 = vunpack.c.h.b16 %v323
        %v492 = vunpack.c.l.b16 %v324
        %v493 = vunpack.c.h.b16 %v324
        %v494 = vunpack.c.l.b16 %v325
        %v495 = vunpack.c.h.b16 %v325
        %v496 = vunpack.c.l.b16 %v326
        %v497 = vunpack.c.h.b16 %v326
        %v498 = vunpack.c.l.b16 %v327
        %v499 = vunpack.c.h.b16 %v327
        %v500 = vunpack.c.l.b16 %v328
        %v501 = vunpack.c.h.b16 %v328
        %v502 = vunpack.c.l.b16 %v329
        %v503 = vunpack.c.h.b16 %v329
        %v504 = vunpack.c.l.b16 %v330
        %v505 = vunpack.c.h.b16 %v330
        %v506 = vunpack.c.l.b16 %v331
        %v507 = vunpack.c.h.b16 %v331
        %v508 = vunpack.c.l.b16 %v332
        %v509 = vunpack.c.h.b16 %v332
        %v510 = vunpack.c.l.b16 %v333
        %v511 = vunpack.c.h.b16 %v333
        %v512 = vunpack.c.l.b16 %v334
        %v513 = vunpack.c.h.b16 %v334
        %v514 = vunpack.c.l.b16 %v335
        %v515 = vunpack.c.h.b16 %v335
        %v516 = vunpack.c.l.b16 %v336
        %v517 = vunpack.c.h.b16 %v336
        %v518 = vunpack.c.l.b16 %v337
        %v519 = vunpack.c.h.b16 %v337
        %v520 = vunpack.c.l.b16 %v338
        %v521 = vunpack.c.h.b16 %v338
        %v522 = vunpack.c.l.b16 %v339
        %v523 = vunpack.c.h.b16 %v339
        %v524 = vunpack.c.l.b16 %v340
        %v525 = vunpack.c.h.b16 %v340
        %v526 = vunpack.c.l.b16 %v341
        %v527 = vunpack.c.h.b16 %v341
        %v528 = vunpack.c.l.b16 %v342
        %v529 = vunpack.c.h.b16 %v342
        %v530 = vunpack.c.l.b16 %v343
        %v531 = vunpack.c.h.b16 %v343
        %v532 = vunpack.c.l.b16 %v344
        %v533 = vunpack.c.h.b16 %v344
        %v534 = vunpack.c.l.b16 %v345
        %v535 = vunpack.c.h.b16 %v345
        %v536 = vunpack.c.l.b16 %v346
        %v537 = vunpack.c.h.b16 %v346
        %v538 = vunpack.c.l.b16 %v347
        %v539 = vunpack.c.h.b16 %v347
        %v540 = vunpack.c.l.b16 %v348
        %v541 = vunpack.c.h.b16 %v348
        %v542 = vunpack.c.l.b16 %v349
        %v543 = vunpack.c.h.b16 %v349
        %v544 = vunpack.c.l.b16 %v350
        %v545 = vunpack.c.h.b16 %v350
        %v546 = vpack.c.b16 %v442, %v438
        %v547 = vpack.c.b16 %v443, %v439
        %v548 = vpack.c.b16 %v444, %v440
        %v549 = vpack.c.b16 %v445, %v441
        %v550 = vpack.c.b16 %v450, %v446
        %v551 = vpack.c.b16 %v451, %v447
        %v552 = vpack.c.b16 %v452, %v448
        %v553 = vpack.c.b16 %v453, %v449
        %v554 = vpack.c.b16 %v458, %v454
        %v555 = vpack.c.b16 %v459, %v455
        %v556 = vpack.c.b16 %v460, %v456
        %v557 = vpack.c.b16 %v461, %v457
        %v558 = vpack.c.b16 %v466, %v462
        %v559 = vpack.c.b16 %v467, %v463
        %v560 = vpack.c.b16 %v468, %v464
        %v561 = vpack.c.b16 %v469, %v465
        %v562 = vpack.c.b16 %v474, %v470
        %v563 = vpack.c.b16 %v475, %v471
        %v564 = vpack.c.b16 %v476, %v472
        %v565 = vpack.c.b16 %v477, %v473
        %v566 = vpack.c.b16 %v482, %v478
        %v567 = vpack.c.b16 %v483, %v479
        %v568 = vpack.c.b16 %v484, %v480
        %v569 = vpack.c.b16 %v485, %v481
        %v570 = vpack.c.b16 %v490, %v486
        %v571 = vpack.c.b16 %v491, %v487
        %v572 = vpack.c.b16 %v492, %v488
        %v573 = vpack.c.b16 %v493, %v489
        %v574 = vpack.c.b16 %v498, %v494
        %v575 = vpack.c.b16 %v499, %v495
        %v576 = vpack.c.b16 %v500, %v496
        %v577 = vpack.c.b16 %v501, %v497
        %v578 = vpack.c.b16 %v506, %v502
        %v579 = vpack.c.b16 %v507, %v503
        %v580 = vpack.c.b16 %v508, %v504
        %v581 = vpack.c.b16 %v509, %v505
        %v582 = vpack.c.b16 %v514, %v510
        %v583 = vpack.c.b16 %v515, %v511
        %v584 = vpack.c.b16 %v516, %v512
        %v585 = vpack.c.b16 %v517, %v513
        %v586 = vpack.c.b16 %v522, %v518
        %v587 = vpack.c.b16 %v523, %v519
        %v588 = vpack.c.b16 %v524, %v520
        %v589 = vpack.c.b16 %v525, %v521
        %v590 = vpack.c.b16 %v530, %v526
        %v591 = vpack.c.b16 %v531, %v527
        %v592 = vpack.c.b16 %v532, %v528
        %v593 = vpack.c.b16 %v533, %v529
        %v594 = vpack.c.b16 %v538, %v534
        %v595 = vpack.c.b16 %v539, %v535
        %v596 = vpack.c.b16 %v540, %v536
        %v597 = vpack.c.b16 %v541, %v537
        %v598 = vpack.c.b16 %v542, %v542
        %v599 = vpack.c.b16 %v543, %v543
        %v600 = vpack.c.b16 %v544, %v544
        %v601 = vpack.c.b16 %v545, %v545
        %vm654 = vcmask 719872
        %v656 = vsel %vm654, %v379, 0
        %v659 = vsel %vm654, %v381, 0
        %vm661 = vcmask 1043456
        %v663 = vsel %vm661, %v598, 0
        %v666 = vsel %vm661, %v599, 0
        %v669 = vsel %vm661, %v600, 0
        %v672 = vsel %vm661, %v601, 0
        %674 = vmatpush.bf16.msra.mxu0 %v574
        %675 = vmatpush.bf16.msra.mxu0 %v570
        %676 = vmatpush.bf16.msra.mxu0 %v566
        %677 = vmatpush.bf16.msra.mxu0 %v562
        %678 = vmatpush.bf16.msra.mxu0 %v558
        %679 = vmatpush.bf16.msra.mxu0 %v554
        %680 = vmatpush.bf16.msra.mxu0 %v550
        %681 = vmatpush.bf16.msra.mxu0 %v546
        %682 = vmatmul.bf16.gmra.mxu0 %v378
        %v683 = vpop.f32.mrf.mxu0
        %v684 = vadd.f32 %v357, %v683
        %v685 = vpop.f32.mrf.mxu0
        %v686 = vadd.f32 %v362, %v685
        %687 = vmatmul.bf16.gmra.mxu0 %v380
        %v688 = vpop.f32.mrf.mxu0
        %v689 = vadd.f32 %v367, %v688
        %v690 = vpop.f32.mrf.mxu0
        %691 = vdwg.mxu0
        %692 = vmatpush.bf16.msra.mxu0 0
        %693 = vmatpush.bf16.msra.mxu0 0
        %694 = vmatpush.bf16.msra.mxu0 %v663
        %695 = vmatpush.bf16.msra.mxu0 %v594
        %696 = vmatpush.bf16.msra.mxu0 %v590
        %697 = vmatpush.bf16.msra.mxu0 %v586
        %698 = vmatpush.bf16.msra.mxu0 %v582
        %699 = vmatpush.bf16.msra.mxu0 %v578
        %700 = vmatmul.bf16.gmra.mxu0 %v656
        %v701 = vpop.f32.mrf.mxu0
        %v702 = vadd.f32 %v684, %v701
        %v703 = vpop.f32.mrf.mxu0
        %v704 = vadd.f32 %v686, %v703
        %705 = vmatmul.bf16.gmra.mxu0 %v659
        %v706 = vpop.f32.mrf.mxu0
        %v707 = vadd.f32 %v689, %v706
        %v708 = vpop.f32.mrf.mxu0
        %709 = vdwg.mxu0
        %710 = vmatpush.bf16.msra.mxu0 %v575
        %711 = vmatpush.bf16.msra.mxu0 %v571
        %712 = vmatpush.bf16.msra.mxu0 %v567
        %713 = vmatpush.bf16.msra.mxu0 %v563
        %714 = vmatpush.bf16.msra.mxu0 %v559
        %715 = vmatpush.bf16.msra.mxu0 %v555
        %716 = vmatpush.bf16.msra.mxu0 %v551
        %717 = vmatpush.bf16.msra.mxu0 %v547
        %718 = vmatmul.bf16.gmra.mxu0 %v378
        %v719 = vpop.f32.mrf.mxu0
        %v720 = vadd.f32 %v357, %v719
        %v721 = vpop.f32.mrf.mxu0
        %v722 = vadd.f32 %v362, %v721
        %723 = vmatmul.bf16.gmra.mxu0 %v380
        %v724 = vpop.f32.mrf.mxu0
        %v725 = vadd.f32 %v367, %v724
        %v726 = vpop.f32.mrf.mxu0
        %727 = vdwg.mxu0
        %728 = vmatpush.bf16.msra.mxu0 0
        %729 = vmatpush.bf16.msra.mxu0 0
        %730 = vmatpush.bf16.msra.mxu0 %v666
        %731 = vmatpush.bf16.msra.mxu0 %v595
        %732 = vmatpush.bf16.msra.mxu0 %v591
        %733 = vmatpush.bf16.msra.mxu0 %v587
        %734 = vmatpush.bf16.msra.mxu0 %v583
        %735 = vmatpush.bf16.msra.mxu0 %v579
        %736 = vmatmul.bf16.gmra.mxu0 %v656
        %v737 = vpop.f32.mrf.mxu0
        %v738 = vadd.f32 %v720, %v737
        %v739 = vpop.f32.mrf.mxu0
        %v740 = vadd.f32 %v722, %v739
        %741 = vmatmul.bf16.gmra.mxu0 %v659
        %v742 = vpop.f32.mrf.mxu0
        %v743 = vadd.f32 %v725, %v742
        %v744 = vpop.f32.mrf.mxu0
        %745 = vdwg.mxu0
        %746 = vmatpush.bf16.msra.mxu0 %v576
        %747 = vmatpush.bf16.msra.mxu0 %v572
        %748 = vmatpush.bf16.msra.mxu0 %v568
        %749 = vmatpush.bf16.msra.mxu0 %v564
        %750 = vmatpush.bf16.msra.mxu0 %v560
        %751 = vmatpush.bf16.msra.mxu0 %v556
        %752 = vmatpush.bf16.msra.mxu0 %v552
        %753 = vmatpush.bf16.msra.mxu0 %v548
        %754 = vmatmul.bf16.gmra.mxu0 %v378
        %v755 = vpop.f32.mrf.mxu0
        %v756 = vadd.f32 %v357, %v755
        %v757 = vpop.f32.mrf.mxu0
        %v758 = vadd.f32 %v362, %v757
        %759 = vmatmul.bf16.gmra.mxu0 %v380
        %v760 = vpop.f32.mrf.mxu0
        %v761 = vadd.f32 %v367, %v760
        %v762 = vpop.f32.mrf.mxu0
        %763 = vdwg.mxu0
        %764 = vmatpush.bf16.msra.mxu0 0
        %765 = vmatpush.bf16.msra.mxu0 0
        %766 = vmatpush.bf16.msra.mxu0 %v669
        %767 = vmatpush.bf16.msra.mxu0 %v596
        %768 = vmatpush.bf16.msra.mxu0 %v592
        %769 = vmatpush.bf16.msra.mxu0 %v588
        %770 = vmatpush.bf16.msra.mxu0 %v584
        %771 = vmatpush.bf16.msra.mxu0 %v580
        %772 = vmatmul.bf16.gmra.mxu0 %v656
        %v773 = vpop.f32.mrf.mxu0
        %v774 = vadd.f32 %v756, %v773
        %v775 = vpop.f32.mrf.mxu0
        %v776 = vadd.f32 %v758, %v775
        %777 = vmatmul.bf16.gmra.mxu0 %v659
        %v778 = vpop.f32.mrf.mxu0
        %v779 = vadd.f32 %v761, %v778
        %v780 = vpop.f32.mrf.mxu0
        %781 = vdwg.mxu0
        %782 = vmatpush.bf16.msra.mxu0 %v577
        %783 = vmatpush.bf16.msra.mxu0 %v573
        %784 = vmatpush.bf16.msra.mxu0 %v569
        %785 = vmatpush.bf16.msra.mxu0 %v565
        %786 = vmatpush.bf16.msra.mxu0 %v561
        %787 = vmatpush.bf16.msra.mxu0 %v557
        %788 = vmatpush.bf16.msra.mxu0 %v553
        %789 = vmatpush.bf16.msra.mxu0 %v549
        %790 = vmatmul.bf16.gmra.mxu0 %v378
        %v791 = vpop.f32.mrf.mxu0
        %v792 = vadd.f32 %v357, %v791
        %v793 = vpop.f32.mrf.mxu0
        %v794 = vadd.f32 %v362, %v793
        %795 = vmatmul.bf16.gmra.mxu0 %v380
        %v796 = vpop.f32.mrf.mxu0
        %v797 = vadd.f32 %v367, %v796
        %v798 = vpop.f32.mrf.mxu0
        %799 = vdwg.mxu0
        %800 = vmatpush.bf16.msra.mxu0 0
        %801 = vmatpush.bf16.msra.mxu0 0
        %802 = vmatpush.bf16.msra.mxu0 %v672
        %803 = vmatpush.bf16.msra.mxu0 %v597
        %804 = vmatpush.bf16.msra.mxu0 %v593
        %805 = vmatpush.bf16.msra.mxu0 %v589
        %806 = vmatpush.bf16.msra.mxu0 %v585
        %807 = vmatpush.bf16.msra.mxu0 %v581
        %808 = vmatmul.bf16.gmra.mxu0 %v656
        %v809 = vpop.f32.mrf.mxu0
        %v810 = vadd.f32 %v792, %v809
        %v811 = vpop.f32.mrf.mxu0
        %v812 = vadd.f32 %v794, %v811
        %813 = vmatmul.bf16.gmra.mxu0 %v659
        %v814 = vpop.f32.mrf.mxu0
        %v815 = vadd.f32 %v797, %v814
        %v816 = vpop.f32.mrf.mxu0
        %817 = vdwg.mxu0
        %v818 = vmax.f32 %v702, 0.0
        %v819 = vmax.f32 %v738, 0.0
        %v820 = vmax.f32 %v774, 0.0
        %v821 = vmax.f32 %v810, 0.0
        %v822 = vmax.f32 %v704, 0.0
        %v823 = vmax.f32 %v740, 0.0
        %v824 = vmax.f32 %v776, 0.0
        %v825 = vmax.f32 %v812, 0.0
        %v826 = vmax.f32 %v707, 0.0
        %v827 = vmax.f32 %v743, 0.0
        %v828 = vmax.f32 %v779, 0.0
        %v829 = vmax.f32 %v815, 0.0
        %v830 = vpack.c.bf16 %v819, %v818
        %v831 = vpack.c.bf16 %v821, %v820
        %v832 = vpack.c.bf16 %v823, %v822
        %v833 = vpack.c.bf16 %v825, %v824
        %v834 = vpack.c.bf16 %v827, %v826
        %v835 = vpack.c.bf16 %v829, %v828
        %836 = vst [vmem:[%s290] sm:$0xff] %v830
        %837 = vst [vmem:[%s290 + $0x8] sm:$0xff] %v831
        %838 = vst [vmem:[%s290 + $0x10] sm:$0xff] %v832
        %839 = vst [vmem:[%s290 + $0x18] sm:$0xff] %v833
        %840 = vst [vmem:[%s290 + $0x20] sm:$0xff] %v834
        %841 = vst [vmem:[%s290 + $0x28] sm:$0xff] %v835
        %s842 = sand.u32 %s90, 1
        %s843 = sand.u32 %s90, 1
        %s844 = smul.addr %s843, 48
        %s845 = scalar_lea.vmem [#allocation3], %s844
        // Predicated region
        $region56: #{_forward.4} parent=50 // pred_check
          %p846 = pneg %p100
        $region57: #{_forward.4} parent=50 // pred_check_branch
          %848 = sbr.rel (%p846) target = $region59
        $region58: #{_forward.4} parent=50 // pred_region
          %s849 = smul.u32 4, %s14
          %s850 = smul.addr %s849, 4
          %s851 = scalar_lea.vmem %s3, %s850
          // Predicated region
          $region60: #{_forward.4} parent=58 // pred_check
            _
          $region61: #{_forward.4} parent=58 // pred_check_branch
            %853 = sbr.rel (0) target = $region63
          $region62: #{_forward.4} parent=58 // pred_region
            // Predicated region
            $region64: #{_forward.4} parent=62 // pred_check
              _
            $region65: #{_forward.4} parent=62 // pred_check_branch
              %855 = sbr.rel (0) target = $region67
            $region66: #{_forward.4} parent=62 // pred_region
              loop: start=0, step=1, limit=1
              $region68: #{_forward.4} parent=66 // loop_pre_header
                _
              $region69: #{_forward.4} parent=66 // loop_header
                %s857 = sphi 0, %s861
                %p858 = scmp.ge.s32.totalorder %s857, 1
                %s862 = sphi %s845, %s845
                %s863 = sphi %s851, %s851
              $region70: #{_forward.4} parent=66 // loop_header_branch
                %860 = sbr.rel (%p858) target = $region74
              $region71: #{_forward.4} parent=66 // loop_body
                %v864 = vld [vmem:[%s862] sm:$0xff]
                %865 = vst [vmem:[%s863] sm:$0xff] %v864
                %v866 = vld [vmem:[%s862 + $0x8] sm:$0xff]
                %867 = vst [vmem:[%s863 + $0x8] sm:$0xff] %v866
                %v868 = vld [vmem:[%s862 + $0x10] sm:$0xff]
                %869 = vst [vmem:[%s863 + $0x20] sm:$0xff] %v868
                %v870 = vld [vmem:[%s862 + $0x18] sm:$0xff]
                %871 = vst [vmem:[%s863 + $0x28] sm:$0xff] %v870
                %v872 = vld [vmem:[%s862 + $0x20] sm:$0xff]
                %873 = vst [vmem:[%s863 + $0x40] sm:$0xff] %v872
                %v874 = vld [vmem:[%s862 + $0x28] sm:$0xff]
                %875 = vst [vmem:[%s863 + $0x48] sm:$0xff] %v874
              $region72: #{_forward.4} parent=66 // loop_footer
                %s861 = sadd.s32 1, %s857
              $region73: #{_forward.4} parent=66 // loop_footer_branch
                %856 = sbr.rel target = $region69
              $region74: #{_forward.4} parent=66 // loop_exit
                _
            $region67: #{_forward.4} parent=62 // pred_fallthru
              _
            // Predicated region
            $region75: #{_forward.4} parent=62 // pred_check
              _
            $region76: #{_forward.4} parent=62 // pred_check_branch
              %877 = sbr.rel target = $region78
            $region77: #{_forward.4} parent=62 // pred_region
              _
            $region78: #{_forward.4} parent=62 // pred_fallthru
              _
          $region63: #{_forward.4} parent=58 // pred_fallthru
            _
          %878 = vnop
        $region59: #{_forward.4} parent=50 // pred_fallthru
          _
      $region51: #{_forward.4} parent=5 // pred_fallthru
        _
      %p879 = scmp.le.s32.totalorder 2, %s9
      // Predicated region
      $region79: #{_forward.4} parent=5 // pred_check
        %p880 = pneg %p879
      $region80: #{_forward.4} parent=5 // pred_check_branch
        %882 = sbr.rel (%p880) target = $region82
      $region81: #{_forward.4} parent=5 // pred_region
        %s883 = ssub.s32 %s9, 2
        // Predicated region
        $region83: #{_forward.4} parent=81 // pred_check
          %p884 = pneg %p106
        $region84: #{_forward.4} parent=81 // pred_check_branch
          %886 = sbr.rel (%p884) target = $region86
        $region85: #{_forward.4} parent=81 // pred_region
          %s887 = sand.u32 %s91, 1
          %s888 = sand.u32 %s91, 1
          %s889 = smul.addr %s888, 48
          %s890 = scalar_lea.vmem [#allocation3], %s889
        $region86: #{_forward.4} parent=81 // pred_fallthru
          _
      $region82: #{_forward.4} parent=5 // pred_fallthru
        _
    $region6: #{_forward.4} parent=1 // loop_footer
      %s13 = sadd.s32 1, %s9
    $region7: #{_forward.4} parent=1 // loop_footer_branch
      %8 = sbr.rel target = $region3
    $region8: #{_forward.4} parent=1 // loop_exit
      _

// kernel: _forward.5
$region0: #{_forward.5}
  #allocation0 [shape = 'u32[]', space=smem, size = 0x4, offset = 0x4, fixed_abs, tag = 'smem constant byte address 0x4 - core index']
  #allocation1 [shape = 'u32[72,128]{1,0:T(1,128)}', space=vmem, size = 0x9000, scoped, tag = 'internal scratch']
  %s0 = inlined_call_operand.vmem [shape: bf16[24,96], index: 0, kind: input, shape index: {}]
  %s1 = inlined_call_operand.vmem [shape: bf16[96,256], index: 1, kind: input, shape index: {}]
  %s2 = inlined_call_operand.vmem [shape: f32[24,1], index: 2, kind: input, shape index: {}]
  %s3 = inlined_call_operand.vmem [shape: f32[24,256], index: 3, kind: output, shape index: {}]
  %s4 = sld [smem:[#allocation0]]
  $region22: #{_forward.5} parent=0
    _
  %s6 = ssub.s32 1, %s4
  %s7 = scalar_select 0, %s6, %s4
  // Predicated region
  $region2: #{_forward.5} parent=0 // pred_check
    _
  $region3: #{_forward.5} parent=0 // pred_check_branch
    %9 = sbr.rel (0) target = $region5
  $region4: #{_forward.5} parent=0 // pred_region
    _
  $region5: #{_forward.5} parent=0 // pred_fallthru
    _
  // Predicated region
  $region6: #{_forward.5} parent=0 // pred_check
    _
  $region7: #{_forward.5} parent=0 // pred_check_branch
    %11 = sbr.rel (0) target = $region9
  $region8: #{_forward.5} parent=0 // pred_region
    _
  $region9: #{_forward.5} parent=0 // pred_fallthru
    _
  // Predicated region
  $region10: #{_forward.5} parent=0 // pred_check
    _
  $region11: #{_forward.5} parent=0 // pred_check_branch
    %13 = sbr.rel (0) target = $region13
  $region12: #{_forward.5} parent=0 // pred_region
    _
  $region13: #{_forward.5} parent=0 // pred_fallthru
    _
  %v15 = vld [vmem:[%s0] sm:$0xf]
  %v16 = vld [vmem:[%s0 + $0x4] sm:$0xf]
  %v17 = vld [vmem:[%s0 + $0x8] sm:$0xf]
  %v18 = vld [vmem:[%s1] sm:$0xff]
  %v19 = vld [vmem:[%s1 + $0x8] sm:$0xff]
  %v20 = vld [vmem:[%s1 + $0x10] sm:$0xff]
  %v21 = vld [vmem:[%s1 + $0x18] sm:$0xff]
  %v22 = vld [vmem:[%s1 + $0x20] sm:$0xff]
  %v23 = vld [vmem:[%s1 + $0x28] sm:$0xff]
  %v24 = vld [vmem:[%s1 + $0x30] sm:$0xff]
  %v25 = vld [vmem:[%s1 + $0x38] sm:$0xff]
  %v26 = vld [vmem:[%s1 + $0x40] sm:$0xff]
  %v27 = vld [vmem:[%s1 + $0x48] sm:$0xff]
  %v28 = vld [vmem:[%s1 + $0x50] sm:$0xff]
  %v29 = vld [vmem:[%s1 + $0x58] sm:$0xff]
  %v30 = vld [vmem:[%s2] sm:$0xff]
  %v31 = vld [vmem:[%s2 + $0x8] sm:$0xff]
  %v32 = vld [vmem:[%s2 + $0x10] sm:$0xff]
  %34 = vset.pattern.permute.xlu0 0
  %35 = vperm.xlu0 %34, %v30
  %v36 = vpop.permute.xlu0 %35
  %39 = vset.pattern.permute.xlu0 0
  %40 = vperm.xlu0 %39, %v31
  %v41 = vpop.permute.xlu0 %40
  %44 = vset.pattern.permute.xlu0 0
  %45 = vperm.xlu0 %44, %v32
  %v46 = vpop.permute.xlu0 %45
  %v51 = vunpack.c.l.b16 %v15
  %v52 = vunpack.c.l.b16 %v16
  %v53 = vunpack.c.l.b16 %v17
  %v54 = vpack.c.b16 %v52, %v51
  %v55 = vpack.c.b16 %v53, %v53
  %v68 = vunpack.c.l.b16 %v18
  %v69 = vunpack.c.h.b16 %v18
  %v70 = vunpack.c.l.b16 %v19
  %v71 = vunpack.c.h.b16 %v19
  %v72 = vunpack.c.l.b16 %v20
  %v73 = vunpack.c.h.b16 %v20
  %v74 = vunpack.c.l.b16 %v21
  %v75 = vunpack.c.h.b16 %v21
  %v76 = vunpack.c.l.b16 %v22
  %v77 = vunpack.c.h.b16 %v22
  %v78 = vunpack.c.l.b16 %v23
  %v79 = vunpack.c.h.b16 %v23
  %v80 = vunpack.c.l.b16 %v24
  %v81 = vunpack.c.h.b16 %v24
  %v82 = vunpack.c.l.b16 %v25
  %v83 = vunpack.c.h.b16 %v25
  %v84 = vunpack.c.l.b16 %v26
  %v85 = vunpack.c.h.b16 %v26
  %v86 = vunpack.c.l.b16 %v27
  %v87 = vunpack.c.h.b16 %v27
  %v88 = vunpack.c.l.b16 %v28
  %v89 = vunpack.c.h.b16 %v28
  %v90 = vunpack.c.l.b16 %v29
  %v91 = vunpack.c.h.b16 %v29
  %v92 = vpack.c.b16 %v70, %v68
  %v93 = vpack.c.b16 %v71, %v69
  %v94 = vpack.c.b16 %v74, %v72
  %v95 = vpack.c.b16 %v75, %v73
  %v96 = vpack.c.b16 %v78, %v76
  %v97 = vpack.c.b16 %v79, %v77
  %v98 = vpack.c.b16 %v82, %v80
  %v99 = vpack.c.b16 %v83, %v81
  %v100 = vpack.c.b16 %v86, %v84
  %v101 = vpack.c.b16 %v87, %v85
  %v102 = vpack.c.b16 %v90, %v88
  %v103 = vpack.c.b16 %v91, %v89
  %vm116 = vcmask 785408
  %v118 = vsel %vm116, %v54, 0
  %v121 = vsel %vm116, %v55, 0
  %123 = vmatpush.bf16.msra.mxu0 0
  %124 = vmatpush.bf16.msra.mxu0 0
  %125 = vmatpush.bf16.msra.mxu0 %v102
  %126 = vmatpush.bf16.msra.mxu0 %v100
  %127 = vmatpush.bf16.msra.mxu0 %v98
  %128 = vmatpush.bf16.msra.mxu0 %v96
  %129 = vmatpush.bf16.msra.mxu0 %v94
  %130 = vmatpush.bf16.msra.mxu0 %v92
  %131 = vmatmul.bf16.gmra.mxu0 %v118
  %v132 = vpop.f32.mrf.mxu0
  %v133 = vadd.f32 %v36, %v132
  %v134 = vpop.f32.mrf.mxu0
  %v135 = vadd.f32 %v41, %v134
  %136 = vmatmul.bf16.gmra.mxu0 %v121
  %v137 = vpop.f32.mrf.mxu0
  %v138 = vadd.f32 %v46, %v137
  %v139 = vpop.f32.mrf.mxu0
  %140 = vdwg.mxu0
  %141 = vmatpush.bf16.msra.mxu0 0
  %142 = vmatpush.bf16.msra.mxu0 0
  %143 = vmatpush.bf16.msra.mxu0 %v103
  %144 = vmatpush.bf16.msra.mxu0 %v101
  %145 = vmatpush.bf16.msra.mxu0 %v99
  %146 = vmatpush.bf16.msra.mxu0 %v97
  %147 = vmatpush.bf16.msra.mxu0 %v95
  %148 = vmatpush.bf16.msra.mxu0 %v93
  %149 = vmatmul.bf16.gmra.mxu0 %v118
  %v150 = vpop.f32.mrf.mxu0
  %v151 = vadd.f32 %v36, %v150
  %v152 = vpop.f32.mrf.mxu0
  %v153 = vadd.f32 %v41, %v152
  %154 = vmatmul.bf16.gmra.mxu0 %v121
  %v155 = vpop.f32.mrf.mxu0
  %v156 = vadd.f32 %v46, %v155
  %v157 = vpop.f32.mrf.mxu0
  %158 = vdwg.mxu0
  %v159 = vmax.f32 %v133, 0.0
  %v160 = vmax.f32 %v151, 0.0
  %v161 = vmax.f32 %v135, 0.0
  %v162 = vmax.f32 %v153, 0.0
  %v163 = vmax.f32 %v138, 0.0
  %v164 = vmax.f32 %v156, 0.0
  %165 = vst [vmem:[%s3] sm:$0xff] %v159
  %166 = vst [vmem:[%s3 + $0x8] sm:$0xff] %v160
  %167 = vst [vmem:[%s3 + $0x10] sm:$0xff] %v161
  %168 = vst [vmem:[%s3 + $0x18] sm:$0xff] %v162
  %169 = vst [vmem:[%s3 + $0x20] sm:$0xff] %v163
  %170 = vst [vmem:[%s3 + $0x28] sm:$0xff] %v164
  // Predicated region
  $region14: #{_forward.5} parent=0 // pred_check
    _
  $region15: #{_forward.5} parent=0 // pred_check_branch
    %172 = sbr.rel (0) target = $region17
  $region16: #{_forward.5} parent=0 // pred_region
    _
  $region17: #{_forward.5} parent=0 // pred_fallthru
    _
  // Predicated region
  $region18: #{_forward.5} parent=0 // pred_check
    _
  $region19: #{_forward.5} parent=0 // pred_check_branch
    %174 = sbr.rel (0) target = $region21
  $region20: #{_forward.5} parent=0 // pred_region
    _
  $region21: #{_forward.5} parent=0 // pred_fallthru
    _

</llo_original>
